<compile_context>
chip_gen: v7x
topology: tpu7x:2x2x1
jax: 0.10.0
libtpu: 0.0.40
codegen_flags: <defaults>
</compile_context>

<pallas_src>
import functools

import numpy as np

import jax
import jax.numpy as jnp
from jax import lax
from jax.experimental import pallas as pl
from jax.experimental.pallas import tpu as pltpu


# ----------------------------- Pass 1 ----------------------------------------
# conv (4 accumulating MXU matmuls: the 2x2 tap decomposition of the 4x4/s2
# filter applied to the space-to-depth input) + per-tile centered BN partials.
def _conv_stats_kernel(x_ref, wt_ref, mask_ref, y_ref, sum_ref, m2_ref,
                       *, tile_h, wo, ws):
    # x_ref:    (1, 1, (tile_h+1)*ws, c4)   bf16  halo window (rows flattened)
    # wt_ref:   (4, c4, cout)               bf16  tap x (4*Cin) x Cout (resident)
    # mask_ref: (l, 1)                      f32   1.0 on real rows, 0.0 on halo col
    # y_ref:    (1, 1, tile_h, wo, cout)    bf16  conv output tile
    # sum_ref:  (1, 1, 1, cout)             f32   per-tile sum
    # m2_ref:   (1, 1, 1, cout)             f32   per-tile centered sum of squares
    l = tile_h * ws - 1
    cout = y_ref.shape[-1]

    acc = jnp.zeros((l, cout), jnp.float32)
    for dh in range(2):
        for dw in range(2):
            off = dh * ws + dw
            lhs = x_ref[0, 0, off:off + l, :]                   # (l, c4) bf16
            acc = acc + jnp.dot(lhs, wt_ref[2 * dh + dw],
                                preferred_element_type=jnp.float32)

    # Per-tile partial stats from the f32 accumulator (centered M2; combined
    # across tiles with Chan's formula in the wrapper -> no cancellation).
    mask = mask_ref[...]                                        # (l, 1)
    count = float(tile_h * wo)
    s = jnp.sum(acc * mask, axis=0, keepdims=True)              # (1, cout)
    mean_t = s * (1.0 / count)
    d = (acc - mean_t) * mask
    m2 = jnp.sum(d * d, axis=0, keepdims=True)                  # (1, cout)
    sum_ref[0, 0] = s                                           # direct stores
    m2_ref[0, 0] = m2

    # Store the conv tile in bf16.  Accumulator rows are q = r*ws + w; the
    # w == wo column is halo garbage, dropped by per-row (static-slice) stores.
    yb = acc.astype(y_ref.dtype)
    for r in range(tile_h):
        y_ref[0, 0, r] = yb[r * ws:r * ws + wo, :]


# ----------------------------- Pass 2 ----------------------------------------
# fused BatchNorm affine (one FMA) + LeakyReLU(0.2); purely memory-bound.
def _bn_act_kernel(y_ref, scale_ref, shift_ref, o_ref, *, slope, use_act):
    # y_ref: (1, 1, tile_h, wo, cout) bf16; scale/shift: (1, 1, cout) f32.
    y = y_ref[0, 0].astype(jnp.float32)
    z = y * scale_ref[...] + shift_ref[...]
    if use_act:
        z = jnp.where(z > 0, z, slope * z)
    o_ref[0, 0] = z


def _pick_tile_h(ho, wo, c4, cout):
    # Keep the per-grid-step VMEM working set (double-buffered halo window +
    # shifted lhs views + f32 accumulator + double-buffered bf16 y tile) at
    # roughly <= 12 MiB so the whole pass fits v7x's 64 MiB VMEM with headroom.
    per_row = 6 * c4 + 10 * cout + 32
    target = max(wo, min(4096, (12 << 20) // max(per_row, 1)))
    for d in range(min(ho, 64), 0, -1):
        if ho % d == 0 and d * wo <= target:
            return d
    return 1


@functools.partial(
    jax.jit,
    static_argnames=("batchnorm", "activation", "channels_last", "tile_h"))
def downsample_conv(x, weight, bias, gamma, beta, *, batchnorm=True,
                    activation=True, channels_last=False, tile_h=None):
    """pix2pix DownSampleConv forward.

    x: (N, Cin, H, W) f32; weight: (Cout, Cin, 4, 4); bias/gamma/beta: (Cout,).
    Conv2d(k=4, s=2, p=1) -> BatchNorm2d (batch stats, eps=1e-5) -> LeakyReLU(0.2).
    """
    nb, cin, h, w = x.shape
    cout, cin_w, kh, kw = weight.shape
    assert cin_w == cin and kh == 4 and kw == 4, "module uses 4x4 filters"
    assert h % 2 == 0 and w % 2 == 0, "even spatial dims (pix2pix geometry)"
    # TODO(synk): generalize the stride-2 space-to-depth decomposition to
    # kernel/stride/padding configs other than the module defaults (4, 2, 1).

    ho, wo = h // 2, w // 2
    hs, ws = ho + 1, wo + 1
    c4 = 4 * cin

    # ---- input restructure (XLA, ~1x traffic; replaces the 4x im2col slab) --
    xb = x.astype(jnp.bfloat16)
    xp = jnp.pad(xb, ((0, 0), (0, 0), (1, 1), (1, 1)))
    xs = xp.reshape(nb, cin, hs, 2, ws, 2)
    xs = xs.transpose(0, 2, 4, 3, 5, 1).reshape(nb, hs, ws, c4)

    # weight -> (tap = 2*dh + dw, ch = ph*2*cin + pw*cin + ci, cout)
    wt = weight.astype(jnp.bfloat16).reshape(cout, cin, 2, 2, 2, 2)
    wt = wt.transpose(2, 4, 3, 5, 1, 0).reshape(4, c4, cout)

    th = tile_h if tile_h is not None else _pick_tile_h(ho, wo, c4, cout)
    assert ho % th == 0, (ho, th)
    n_h = ho // th
    l = th * ws - 1

    # Per-tile halo windows (duplication factor (th+1)/th ~ 1, vs 4x for im2col).
    if n_h == 1:
        xr = xs[:, None]
    else:
        idx = np.arange(n_h)[:, None] * th + np.arange(th + 1)[None, :]
        xr = xs[:, idx]
    xr = xr.reshape(nb, n_h, (th + 1) * ws, c4)

    q = np.arange(l)
    mask = jnp.asarray(((q % ws) < wo).astype(np.float32).reshape(l, 1))

    # ---- VMEM sizing / compiler params ---------------------------------------
    est = (2 * (th + 1) * ws * c4 * 2      # halo window, double-buffered
           + 2 * 4 * c4 * cout * 2         # weights (constant index_map)
           + 2 * th * wo * cout * 2        # bf16 y tile, double-buffered
           + l * cout * 4                  # f32 accumulator
           + 4 * l * c4 * 2                # shifted lhs views
           + (2 << 20))
    vmem_limit = int(min(max(32 << 20, 2 * est), 48 << 20))   # v7x headroom
    cparams = pltpu.CompilerParams(
        dimension_semantics=("parallel", "parallel"),          # v7x dual-TC
        vmem_limit_bytes=vmem_limit,
    )

    # ---- Pass 1: conv + per-tile partial stats --------------------------------
    y, sums, m2s = pl.pallas_call(
        functools.partial(_conv_stats_kernel, tile_h=th, wo=wo, ws=ws),
        grid=(nb, n_h),
        in_specs=(
            pl.BlockSpec((1, 1, (th + 1) * ws, c4), lambda i, j: (i, j, 0, 0)),
            pl.BlockSpec((4, c4, cout), lambda i, j: (0, 0, 0)),   # resident
            pl.BlockSpec((l, 1), lambda i, j: (0, 0)),
        ),
        out_specs=(
            pl.BlockSpec((1, 1, th, wo, cout), lambda i, j: (i, j, 0, 0, 0)),
            pl.BlockSpec((1, 1, 1, cout), lambda i, j: (i, j, 0, 0)),
            pl.BlockSpec((1, 1, 1, cout), lambda i, j: (i, j, 0, 0)),
        ),
        out_shape=(
            jax.ShapeDtypeStruct((nb, n_h, th, wo, cout), jnp.bfloat16),
            jax.ShapeDtypeStruct((nb, n_h, 1, cout), jnp.float32),
            jax.ShapeDtypeStruct((nb, n_h, 1, cout), jnp.float32),
        ),
        compiler_params=cparams,
    )(xr, wt, mask)

    # ---- BN finalize (tiny; Chan combine of per-tile (sum, M2)) ---------------
    r_count = th * wo
    m_total = nb * ho * wo
    if batchnorm:
        sum_t = sums.reshape(-1, cout)
        m2_t = m2s.reshape(-1, cout)
        mean = jnp.sum(sum_t, axis=0) / m_total
        mean_t = sum_t / r_count
        m2 = jnp.sum(m2_t, axis=0) + r_count * jnp.sum(
            (mean_t - mean[None, :]) ** 2, axis=0)
        var = jnp.maximum(m2 / m_total, 0.0)
        inv = lax.rsqrt(var + 1e-5)
        scale = gamma.astype(jnp.float32) * inv
        # NOTE: the conv bias is cancelled exactly by the training-mode
        # (batch-stats) mean subtraction, so it is folded away here.  If this
        # block is ever run with eval-mode running stats, bias must be added.
        shift = beta.astype(jnp.float32) - mean * scale
    else:
        scale = jnp.ones((cout,), jnp.float32)
        shift = bias.astype(jnp.float32)

    scale3 = scale.reshape(1, 1, cout)
    shift3 = shift.reshape(1, 1, cout)

    # ---- Pass 2: fused BN affine + LeakyReLU, NHWC-contiguous output ----------
    out5 = pl.pallas_call(
        functools.partial(_bn_act_kernel, slope=0.2, use_act=activation),
        grid=(nb, n_h),
        in_specs=(
            pl.BlockSpec((1, 1, th, wo, cout), lambda i, j: (i, j, 0, 0, 0)),
            pl.BlockSpec((1, 1, cout), lambda i, j: (0, 0, 0)),
            pl.BlockSpec((1, 1, cout), lambda i, j: (0, 0, 0)),
        ),
        out_specs=pl.BlockSpec((1, 1, th, wo, cout),
                               lambda i, j: (i, j, 0, 0, 0)),
        out_shape=jax.ShapeDtypeStruct((nb, n_h, th, wo, cout), jnp.float32),
        compiler_params=cparams,
    )(y, scale3, shift3)

    out = out5.reshape(nb, ho, wo, cout)      # free: row-major contiguous
    if channels_last:
        return out                            # NHWC: no epilogue transpose
    # NCHW to match the PyTorch module; this transpose is the only remaining
    # XLA epilogue pass (skip it with channels_last=True).
    return out.transpose(0, 3, 1, 2)


def _reference(x, weight, bias, gamma, beta):
    y = lax.conv_general_dilated(
        x, weight, window_strides=(2, 2), padding=((1, 1), (1, 1)),
        dimension_numbers=("NCHW", "OIHW", "NCHW"))
    y = y + bias.reshape(1, -1, 1, 1)
    mean = jnp.mean(y, axis=(0, 2, 3), keepdims=True)
    var = jnp.mean((y - mean) ** 2, axis=(0, 2, 3), keepdims=True)
    y = (y - mean) * lax.rsqrt(var + 1e-5)
    y = y * gamma.reshape(1, -1, 1, 1) + beta.reshape(1, -1, 1, 1)
    return jnp.where(y > 0, y, 0.2 * y)


if __name__ == "__main__":
    key = jax.random.PRNGKey(0)
    k_x, k_w, k_b = jax.random.split(key, 3)

    N, Cin, H, W = 2, 4, 16, 16
    Cout = 8

    x = jax.random.normal(k_x, (N, Cin, H, W), dtype=jnp.float32)
    weight = jax.random.normal(k_w, (Cout, Cin, 4, 4), dtype=jnp.float32) * 0.1
    bias = jax.random.normal(k_b, (Cout,), dtype=jnp.float32) * 0.1
    gamma = jnp.ones((Cout,), dtype=jnp.float32)   # BatchNorm2d init: weight = 1
    beta = jnp.zeros((Cout,), dtype=jnp.float32)   # BatchNorm2d init: bias = 0

    ref = jax.block_until_ready(_reference(x, weight, bias, gamma, beta))

    # Default path (auto tile_h -> one h-tile per image at this size).
    out = jax.block_until_ready(downsample_conv(x, weight, bias, gamma, beta))
    assert out.shape == (N, Cout, H // 2, W // 2), out.shape
    err = float(jnp.max(jnp.abs(out - ref)))
    assert jnp.allclose(out, ref, atol=5e-2, rtol=5e-2), err

    # Multi-tile path: exercises the halo gather, per-row stores and the
    # cross-tile Chan stats combine (grid = (2 batches, 4 h-tiles)).
    out2 = jax.block_until_ready(
        downsample_conv(x, weight, bias, gamma, beta, tile_h=2))
    err2 = float(jnp.max(jnp.abs(out2 - ref)))
    assert jnp.allclose(out2, ref, atol=5e-2, rtol=5e-2), err2

    print("KERNEL_OK")
</pallas_src>

<mosaic_0001>
module attributes {stable_mosaic.version = 11 : i64} {
  func.func @_conv_stats_kernel(%arg0: i32, %arg1: i32, %arg2: memref<1x1x81x16xbf16, #tpu.memory_space<vmem>>, %arg3: memref<4x16x8xbf16, #tpu.memory_space<vmem>>, %arg4: memref<71x1xf32, #tpu.memory_space<vmem>>, %arg5: memref<1x1x8x8x8xbf16, #tpu.memory_space<vmem>>, %arg6: memref<1x1x1x8xf32, #tpu.memory_space<vmem>>, %arg7: memref<1x1x1x8xf32, #tpu.memory_space<vmem>>) attributes {dimension_semantics = [#tpu.dimension_semantics<parallel>, #tpu.dimension_semantics<parallel>], iteration_bounds = array<i64: 2, 1>, scalar_prefetch = 0 : i64, scratch_operands = 0 : i64, tpu.core_type = #tpu.core_type<tc>, window_params = [{transform_indices = @transform_0, window_bounds = array<i64: 1, 1, 81, 16>}, {pipeline_mode = #tpu.pipeline_mode<synchronous>, transform_indices = @transform_1, window_bounds = array<i64: 4, 16, 8>}, {pipeline_mode = #tpu.pipeline_mode<synchronous>, transform_indices = @transform_2, window_bounds = array<i64: 71, 1>}, {transform_indices = @transform_3, window_bounds = array<i64: 1, 1, 8, 8, 8>}, {transform_indices = @transform_4, window_bounds = array<i64: 1, 1, 1, 8>}, {transform_indices = @transform_5, window_bounds = array<i64: 1, 1, 1, 8>}]} {
    %cst = arith.constant 0.000000e+00 : f32
    %0 = vector.broadcast %cst : f32 to vector<71x8xf32>
    %c0 = arith.constant 0 : index
    %c0_0 = arith.constant 0 : index
    %c0_1 = arith.constant 0 : index
    %c0_2 = arith.constant 0 : index
    %1 = vector.load %arg2[%c0, %c0_0, %c0_1, %c0_2] : memref<1x1x81x16xbf16, #tpu.memory_space<vmem>>, vector<1x1x71x16xbf16>
    %2 = vector.shape_cast %1 : vector<1x1x71x16xbf16> to vector<71x16xbf16>
    %c0_3 = arith.constant 0 : index
    %c0_4 = arith.constant 0 : index
    %c0_5 = arith.constant 0 : index
    %3 = vector.load %arg3[%c0_3, %c0_4, %c0_5] : memref<4x16x8xbf16, #tpu.memory_space<vmem>>, vector<1x16x8xbf16>
    %4 = vector.shape_cast %3 : vector<1x16x8xbf16> to vector<16x8xbf16>
    %cst_6 = arith.constant dense<0.000000e+00> : vector<71x8xf32>
    %5 = tpu.matmul %2, %4, %cst_6 {dimension_numbers = #tpu.dot_dimension_numbers<[1], [0], [0], [1], [0, 0, 1, 1], [], []>} : vector<71x16xbf16>, vector<16x8xbf16>, vector<71x8xf32> -> vector<71x8xf32>
    %6 = arith.addf %0, %5 : vector<71x8xf32>
    %c0_7 = arith.constant 0 : index
    %c0_8 = arith.constant 0 : index
    %c1 = arith.constant 1 : index
    %c0_9 = arith.constant 0 : index
    %7 = vector.load %arg2[%c0_7, %c0_8, %c1, %c0_9] : memref<1x1x81x16xbf16, #tpu.memory_space<vmem>>, vector<1x1x71x16xbf16>
    %8 = vector.shape_cast %7 : vector<1x1x71x16xbf16> to vector<71x16xbf16>
    %c1_10 = arith.constant 1 : index
    %c0_11 = arith.constant 0 : index
    %c0_12 = arith.constant 0 : index
    %9 = vector.load %arg3[%c1_10, %c0_11, %c0_12] : memref<4x16x8xbf16, #tpu.memory_space<vmem>>, vector<1x16x8xbf16>
    %10 = vector.shape_cast %9 : vector<1x16x8xbf16> to vector<16x8xbf16>
    %cst_13 = arith.constant dense<0.000000e+00> : vector<71x8xf32>
    %11 = tpu.matmul %8, %10, %cst_13 {dimension_numbers = #tpu.dot_dimension_numbers<[1], [0], [0], [1], [0, 0, 1, 1], [], []>} : vector<71x16xbf16>, vector<16x8xbf16>, vector<71x8xf32> -> vector<71x8xf32>
    %12 = arith.addf %6, %11 : vector<71x8xf32>
    %c0_14 = arith.constant 0 : index
    %c0_15 = arith.constant 0 : index
    %c9 = arith.constant 9 : index
    %c0_16 = arith.constant 0 : index
    %13 = vector.load %arg2[%c0_14, %c0_15, %c9, %c0_16] : memref<1x1x81x16xbf16, #tpu.memory_space<vmem>>, vector<1x1x71x16xbf16>
    %14 = vector.shape_cast %13 : vector<1x1x71x16xbf16> to vector<71x16xbf16>
    %c2 = arith.constant 2 : index
    %c0_17 = arith.constant 0 : index
    %c0_18 = arith.constant 0 : index
    %15 = vector.load %arg3[%c2, %c0_17, %c0_18] : memref<4x16x8xbf16, #tpu.memory_space<vmem>>, vector<1x16x8xbf16>
    %16 = vector.shape_cast %15 : vector<1x16x8xbf16> to vector<16x8xbf16>
    %cst_19 = arith.constant dense<0.000000e+00> : vector<71x8xf32>
    %17 = tpu.matmul %14, %16, %cst_19 {dimension_numbers = #tpu.dot_dimension_numbers<[1], [0], [0], [1], [0, 0, 1, 1], [], []>} : vector<71x16xbf16>, vector<16x8xbf16>, vector<71x8xf32> -> vector<71x8xf32>
    %18 = arith.addf %12, %17 : vector<71x8xf32>
    %c0_20 = arith.constant 0 : index
    %c0_21 = arith.constant 0 : index
    %c10 = arith.constant 10 : index
    %c0_22 = arith.constant 0 : index
    %19 = vector.load %arg2[%c0_20, %c0_21, %c10, %c0_22] : memref<1x1x81x16xbf16, #tpu.memory_space<vmem>>, vector<1x1x71x16xbf16>
    %20 = vector.shape_cast %19 : vector<1x1x71x16xbf16> to vector<71x16xbf16>
    %c3 = arith.constant 3 : index
    %c0_23 = arith.constant 0 : index
    %c0_24 = arith.constant 0 : index
    %21 = vector.load %arg3[%c3, %c0_23, %c0_24] : memref<4x16x8xbf16, #tpu.memory_space<vmem>>, vector<1x16x8xbf16>
    %22 = vector.shape_cast %21 : vector<1x16x8xbf16> to vector<16x8xbf16>
    %cst_25 = arith.constant dense<0.000000e+00> : vector<71x8xf32>
    %23 = tpu.matmul %20, %22, %cst_25 {dimension_numbers = #tpu.dot_dimension_numbers<[1], [0], [0], [1], [0, 0, 1, 1], [], []>} : vector<71x16xbf16>, vector<16x8xbf16>, vector<71x8xf32> -> vector<71x8xf32>
    %24 = arith.addf %18, %23 : vector<71x8xf32>
    %c0_26 = arith.constant 0 : index
    %c0_27 = arith.constant 0 : index
    %25 = vector.load %arg4[%c0_26, %c0_27] : memref<71x1xf32, #tpu.memory_space<vmem>>, vector<71x1xf32>
    %26 = vector.broadcast %25 : vector<71x1xf32> to vector<71x8xf32>
    %27 = arith.mulf %24, %26 : vector<71x8xf32>
    %cst_28 = arith.constant dense<0.000000e+00> : vector<8xf32>
    %28 = vector.multi_reduction <add>, %27, %cst_28 [0] : vector<71x8xf32> to vector<8xf32>
    %29 = vector.shape_cast %28 : vector<8xf32> to vector<1x8xf32>
    %cst_29 = arith.constant 1.562500e-02 : f32
    %30 = vector.broadcast %cst_29 : f32 to vector<1x8xf32>
    %31 = arith.mulf %29, %30 : vector<1x8xf32>
    %32 = vector.broadcast %31 : vector<1x8xf32> to vector<71x8xf32>
    %33 = arith.subf %24, %32 : vector<71x8xf32>
    %34 = vector.broadcast %25 : vector<71x1xf32> to vector<71x8xf32>
    %35 = arith.mulf %33, %34 : vector<71x8xf32>
    %36 = arith.mulf %35, %35 : vector<71x8xf32>
    %cst_30 = arith.constant dense<0.000000e+00> : vector<8xf32>
    %37 = vector.multi_reduction <add>, %36, %cst_30 [0] : vector<71x8xf32> to vector<8xf32>
    %38 = vector.shape_cast %37 : vector<8xf32> to vector<1x8xf32>
    %c0_31 = arith.constant 0 : index
    %c0_32 = arith.constant 0 : index
    %c0_33 = arith.constant 0 : index
    %c0_34 = arith.constant 0 : index
    %39 = vector.load %arg6[%c0_31, %c0_32, %c0_33, %c0_34] : memref<1x1x1x8xf32, #tpu.memory_space<vmem>>, vector<1x1x1x8xf32>
    %40 = vector.shape_cast %39 : vector<1x1x1x8xf32> to vector<1x8xf32>
    %41 = vector.shape_cast %29 : vector<1x8xf32> to vector<1x1x1x8xf32>
    tpu.vector_store %arg6[%c0_31, %c0_32, %c0_33, %c0_34], %41 {strides = array<i32>} : memref<1x1x1x8xf32, #tpu.memory_space<vmem>>, vector<1x1x1x8xf32>,
    %c0_35 = arith.constant 0 : index
    %c0_36 = arith.constant 0 : index
    %c0_37 = arith.constant 0 : index
    %c0_38 = arith.constant 0 : index
    %42 = vector.load %arg7[%c0_35, %c0_36, %c0_37, %c0_38] : memref<1x1x1x8xf32, #tpu.memory_space<vmem>>, vector<1x1x1x8xf32>
    %43 = vector.shape_cast %42 : vector<1x1x1x8xf32> to vector<1x8xf32>
    %44 = vector.shape_cast %38 : vector<1x8xf32> to vector<1x1x1x8xf32>
    tpu.vector_store %arg7[%c0_35, %c0_36, %c0_37, %c0_38], %44 {strides = array<i32>} : memref<1x1x1x8xf32, #tpu.memory_space<vmem>>, vector<1x1x1x8xf32>,
    %45 = arith.truncf %24 : vector<71x8xf32> to vector<71x8xbf16>
    %46 = vector.extract_strided_slice %45 {offsets = [0, 0], sizes = [8, 8], strides = [1, 1]} : vector<71x8xbf16> to vector<8x8xbf16>
    %c0_39 = arith.constant 0 : index
    %c0_40 = arith.constant 0 : index
    %c0_41 = arith.constant 0 : index
    %c0_42 = arith.constant 0 : index
    %c0_43 = arith.constant 0 : index
    %47 = vector.load %arg5[%c0_39, %c0_40, %c0_41, %c0_42, %c0_43] : memref<1x1x8x8x8xbf16, #tpu.memory_space<vmem>>, vector<1x1x1x8x8xbf16>
    %48 = vector.shape_cast %47 : vector<1x1x1x8x8xbf16> to vector<8x8xbf16>
    %49 = vector.shape_cast %46 : vector<8x8xbf16> to vector<1x1x1x8x8xbf16>
    tpu.vector_store %arg5[%c0_39, %c0_40, %c0_41, %c0_42, %c0_43], %49 {strides = array<i32>} : memref<1x1x8x8x8xbf16, #tpu.memory_space<vmem>>, vector<1x1x1x8x8xbf16>,
    %50 = vector.extract_strided_slice %45 {offsets = [9, 0], sizes = [8, 8], strides = [1, 1]} : vector<71x8xbf16> to vector<8x8xbf16>
    %c0_44 = arith.constant 0 : index
    %c0_45 = arith.constant 0 : index
    %c1_46 = arith.constant 1 : index
    %c0_47 = arith.constant 0 : index
    %c0_48 = arith.constant 0 : index
    %51 = vector.load %arg5[%c0_44, %c0_45, %c1_46, %c0_47, %c0_48] : memref<1x1x8x8x8xbf16, #tpu.memory_space<vmem>>, vector<1x1x1x8x8xbf16>
    %52 = vector.shape_cast %51 : vector<1x1x1x8x8xbf16> to vector<8x8xbf16>
    %53 = vector.shape_cast %50 : vector<8x8xbf16> to vector<1x1x1x8x8xbf16>
    tpu.vector_store %arg5[%c0_44, %c0_45, %c1_46, %c0_47, %c0_48], %53 {strides = array<i32>} : memref<1x1x8x8x8xbf16, #tpu.memory_space<vmem>>, vector<1x1x1x8x8xbf16>,
    %54 = vector.extract_strided_slice %45 {offsets = [18, 0], sizes = [8, 8], strides = [1, 1]} : vector<71x8xbf16> to vector<8x8xbf16>
    %c0_49 = arith.constant 0 : index
    %c0_50 = arith.constant 0 : index
    %c2_51 = arith.constant 2 : index
    %c0_52 = arith.constant 0 : index
    %c0_53 = arith.constant 0 : index
    %55 = vector.load %arg5[%c0_49, %c0_50, %c2_51, %c0_52, %c0_53] : memref<1x1x8x8x8xbf16, #tpu.memory_space<vmem>>, vector<1x1x1x8x8xbf16>
    %56 = vector.shape_cast %55 : vector<1x1x1x8x8xbf16> to vector<8x8xbf16>
    %57 = vector.shape_cast %54 : vector<8x8xbf16> to vector<1x1x1x8x8xbf16>
    tpu.vector_store %arg5[%c0_49, %c0_50, %c2_51, %c0_52, %c0_53], %57 {strides = array<i32>} : memref<1x1x8x8x8xbf16, #tpu.memory_space<vmem>>, vector<1x1x1x8x8xbf16>,
    %58 = vector.extract_strided_slice %45 {offsets = [27, 0], sizes = [8, 8], strides = [1, 1]} : vector<71x8xbf16> to vector<8x8xbf16>
    %c0_54 = arith.constant 0 : index
    %c0_55 = arith.constant 0 : index
    %c3_56 = arith.constant 3 : index
    %c0_57 = arith.constant 0 : index
    %c0_58 = arith.constant 0 : index
    %59 = vector.load %arg5[%c0_54, %c0_55, %c3_56, %c0_57, %c0_58] : memref<1x1x8x8x8xbf16, #tpu.memory_space<vmem>>, vector<1x1x1x8x8xbf16>
    %60 = vector.shape_cast %59 : vector<1x1x1x8x8xbf16> to vector<8x8xbf16>
    %61 = vector.shape_cast %58 : vector<8x8xbf16> to vector<1x1x1x8x8xbf16>
    tpu.vector_store %arg5[%c0_54, %c0_55, %c3_56, %c0_57, %c0_58], %61 {strides = array<i32>} : memref<1x1x8x8x8xbf16, #tpu.memory_space<vmem>>, vector<1x1x1x8x8xbf16>,
    %62 = vector.extract_strided_slice %45 {offsets = [36, 0], sizes = [8, 8], strides = [1, 1]} : vector<71x8xbf16> to vector<8x8xbf16>
    %c0_59 = arith.constant 0 : index
    %c0_60 = arith.constant 0 : index
    %c4 = arith.constant 4 : index
    %c0_61 = arith.constant 0 : index
    %c0_62 = arith.constant 0 : index
    %63 = vector.load %arg5[%c0_59, %c0_60, %c4, %c0_61, %c0_62] : memref<1x1x8x8x8xbf16, #tpu.memory_space<vmem>>, vector<1x1x1x8x8xbf16>
    %64 = vector.shape_cast %63 : vector<1x1x1x8x8xbf16> to vector<8x8xbf16>
    %65 = vector.shape_cast %62 : vector<8x8xbf16> to vector<1x1x1x8x8xbf16>
    tpu.vector_store %arg5[%c0_59, %c0_60, %c4, %c0_61, %c0_62], %65 {strides = array<i32>} : memref<1x1x8x8x8xbf16, #tpu.memory_space<vmem>>, vector<1x1x1x8x8xbf16>,
    %66 = vector.extract_strided_slice %45 {offsets = [45, 0], sizes = [8, 8], strides = [1, 1]} : vector<71x8xbf16> to vector<8x8xbf16>
    %c0_63 = arith.constant 0 : index
    %c0_64 = arith.constant 0 : index
    %c5 = arith.constant 5 : index
    %c0_65 = arith.constant 0 : index
    %c0_66 = arith.constant 0 : index
    %67 = vector.load %arg5[%c0_63, %c0_64, %c5, %c0_65, %c0_66] : memref<1x1x8x8x8xbf16, #tpu.memory_space<vmem>>, vector<1x1x1x8x8xbf16>
    %68 = vector.shape_cast %67 : vector<1x1x1x8x8xbf16> to vector<8x8xbf16>
    %69 = vector.shape_cast %66 : vector<8x8xbf16> to vector<1x1x1x8x8xbf16>
    tpu.vector_store %arg5[%c0_63, %c0_64, %c5, %c0_65, %c0_66], %69 {strides = array<i32>} : memref<1x1x8x8x8xbf16, #tpu.memory_space<vmem>>, vector<1x1x1x8x8xbf16>,
    %70 = vector.extract_strided_slice %45 {offsets = [54, 0], sizes = [8, 8], strides = [1, 1]} : vector<71x8xbf16> to vector<8x8xbf16>
    %c0_67 = arith.constant 0 : index
    %c0_68 = arith.constant 0 : index
    %c6 = arith.constant 6 : index
    %c0_69 = arith.constant 0 : index
    %c0_70 = arith.constant 0 : index
    %71 = vector.load %arg5[%c0_67, %c0_68, %c6, %c0_69, %c0_70] : memref<1x1x8x8x8xbf16, #tpu.memory_space<vmem>>, vector<1x1x1x8x8xbf16>
    %72 = vector.shape_cast %71 : vector<1x1x1x8x8xbf16> to vector<8x8xbf16>
    %73 = vector.shape_cast %70 : vector<8x8xbf16> to vector<1x1x1x8x8xbf16>
    tpu.vector_store %arg5[%c0_67, %c0_68, %c6, %c0_69, %c0_70], %73 {strides = array<i32>} : memref<1x1x8x8x8xbf16, #tpu.memory_space<vmem>>, vector<1x1x1x8x8xbf16>,
    %74 = vector.extract_strided_slice %45 {offsets = [63, 0], sizes = [8, 8], strides = [1, 1]} : vector<71x8xbf16> to vector<8x8xbf16>
    %c0_71 = arith.constant 0 : index
    %c0_72 = arith.constant 0 : index
    %c7 = arith.constant 7 : index
    %c0_73 = arith.constant 0 : index
    %c0_74 = arith.constant 0 : index
    %75 = vector.load %arg5[%c0_71, %c0_72, %c7, %c0_73, %c0_74] : memref<1x1x8x8x8xbf16, #tpu.memory_space<vmem>>, vector<1x1x1x8x8xbf16>
    %76 = vector.shape_cast %75 : vector<1x1x1x8x8xbf16> to vector<8x8xbf16>
    %77 = vector.shape_cast %74 : vector<8x8xbf16> to vector<1x1x1x8x8xbf16>
    tpu.vector_store %arg5[%c0_71, %c0_72, %c7, %c0_73, %c0_74], %77 {strides = array<i32>} : memref<1x1x8x8x8xbf16, #tpu.memory_space<vmem>>, vector<1x1x1x8x8xbf16>,
    return
  }
  func.func @transform_0(%arg0: i32, %arg1: i32) -> (i32, i32, i32, i32) {
    %c0_i32 = arith.constant 0 : i32
    %c0_i32_0 = arith.constant 0 : i32
    %c0_i32_1 = arith.constant 0 : i32
    return %arg0, %arg1, %c0_i32, %c0_i32_0 : i32, i32, i32, i32
  }
  func.func @transform_1(%arg0: i32, %arg1: i32) -> (i32, i32, i32) {
    %c0_i32 = arith.constant 0 : i32
    %c0_i32_0 = arith.constant 0 : i32
    %c0_i32_1 = arith.constant 0 : i32
    %c0_i32_2 = arith.constant 0 : i32
    return %c0_i32, %c0_i32_0, %c0_i32_1 : i32, i32, i32
  }
  func.func @transform_2(%arg0: i32, %arg1: i32) -> (i32, i32) {
    %c0_i32 = arith.constant 0 : i32
    %c0_i32_0 = arith.constant 0 : i32
    %c0_i32_1 = arith.constant 0 : i32
    return %c0_i32, %c0_i32_0 : i32, i32
  }
  func.func @transform_3(%arg0: i32, %arg1: i32) -> (i32, i32, i32, i32, i32) {
    %c0_i32 = arith.constant 0 : i32
    %c0_i32_0 = arith.constant 0 : i32
    %c0_i32_1 = arith.constant 0 : i32
    %c0_i32_2 = arith.constant 0 : i32
    return %arg0, %arg1, %c0_i32, %c0_i32_0, %c0_i32_1 : i32, i32, i32, i32, i32
  }
  func.func @transform_4(%arg0: i32, %arg1: i32) -> (i32, i32, i32, i32) {
    %c0_i32 = arith.constant 0 : i32
    %c0_i32_0 = arith.constant 0 : i32
    %c0_i32_1 = arith.constant 0 : i32
    return %arg0, %arg1, %c0_i32, %c0_i32_0 : i32, i32, i32, i32
  }
  func.func @transform_5(%arg0: i32, %arg1: i32) -> (i32, i32, i32, i32) {
    %c0_i32 = arith.constant 0 : i32
    %c0_i32_0 = arith.constant 0 : i32
    %c0_i32_1 = arith.constant 0 : i32
    return %arg0, %arg1, %c0_i32, %c0_i32_0 : i32, i32, i32, i32
  }
}

module attributes {stable_mosaic.version = 11 : i64} {
  func.func @_bn_act_kernel(%arg0: i32, %arg1: i32, %arg2: memref<1x1x8x8x8xbf16, #tpu.memory_space<vmem>>, %arg3: memref<1x1x8xf32, #tpu.memory_space<vmem>>, %arg4: memref<1x1x8xf32, #tpu.memory_space<vmem>>, %arg5: memref<1x1x8x8x8xf32, #tpu.memory_space<vmem>>) attributes {dimension_semantics = [#tpu.dimension_semantics<parallel>, #tpu.dimension_semantics<parallel>], iteration_bounds = array<i64: 2, 1>, scalar_prefetch = 0 : i64, scratch_operands = 0 : i64, tpu.core_type = #tpu.core_type<tc>, window_params = [{transform_indices = @transform_0, window_bounds = array<i64: 1, 1, 8, 8, 8>}, {pipeline_mode = #tpu.pipeline_mode<synchronous>, transform_indices = @transform_1, window_bounds = array<i64: 1, 1, 8>}, {pipeline_mode = #tpu.pipeline_mode<synchronous>, transform_indices = @transform_2, window_bounds = array<i64: 1, 1, 8>}, {transform_indices = @transform_3, window_bounds = array<i64: 1, 1, 8, 8, 8>}]} {
    %c0 = arith.constant 0 : index
    %c0_0 = arith.constant 0 : index
    %c0_1 = arith.constant 0 : index
    %c0_2 = arith.constant 0 : index
    %c0_3 = arith.constant 0 : index
    %0 = vector.load %arg2[%c0, %c0_0, %c0_1, %c0_2, %c0_3] : memref<1x1x8x8x8xbf16, #tpu.memory_space<vmem>>, vector<1x1x8x8x8xbf16>
    %1 = vector.shape_cast %0 : vector<1x1x8x8x8xbf16> to vector<8x8x8xbf16>
    %2 = arith.extf %1 : vector<8x8x8xbf16> to vector<8x8x8xf32>
    %c0_4 = arith.constant 0 : index
    %c0_5 = arith.constant 0 : index
    %c0_6 = arith.constant 0 : index
    %3 = vector.load %arg3[%c0_4, %c0_5, %c0_6] : memref<1x1x8xf32, #tpu.memory_space<vmem>>, vector<1x1x8xf32>
    %4 = vector.broadcast %3 : vector<1x1x8xf32> to vector<8x8x8xf32>
    %5 = arith.mulf %2, %4 : vector<8x8x8xf32>
    %c0_7 = arith.constant 0 : index
    %c0_8 = arith.constant 0 : index
    %c0_9 = arith.constant 0 : index
    %6 = vector.load %arg4[%c0_7, %c0_8, %c0_9] : memref<1x1x8xf32, #tpu.memory_space<vmem>>, vector<1x1x8xf32>
    %7 = vector.broadcast %6 : vector<1x1x8xf32> to vector<8x8x8xf32>
    %8 = arith.addf %5, %7 : vector<8x8x8xf32>
    %cst = arith.constant 0.000000e+00 : f32
    %9 = vector.broadcast %cst : f32 to vector<8x8x8xf32>
    %10 = arith.cmpf ogt, %8, %9 : vector<8x8x8xf32>
    %cst_10 = arith.constant 2.000000e-01 : f32
    %11 = vector.broadcast %cst_10 : f32 to vector<8x8x8xf32>
    %12 = arith.mulf %11, %8 : vector<8x8x8xf32>
    %13 = arith.select %10, %8, %12 : vector<8x8x8xi1>, vector<8x8x8xf32>
    %c0_11 = arith.constant 0 : index
    %c0_12 = arith.constant 0 : index
    %c0_13 = arith.constant 0 : index
    %c0_14 = arith.constant 0 : index
    %c0_15 = arith.constant 0 : index
    %14 = vector.load %arg5[%c0_11, %c0_12, %c0_13, %c0_14, %c0_15] : memref<1x1x8x8x8xf32, #tpu.memory_space<vmem>>, vector<1x1x8x8x8xf32>
    %15 = vector.shape_cast %14 : vector<1x1x8x8x8xf32> to vector<8x8x8xf32>
    %16 = vector.shape_cast %13 : vector<8x8x8xf32> to vector<1x1x8x8x8xf32>
    tpu.vector_store %arg5[%c0_11, %c0_12, %c0_13, %c0_14, %c0_15], %16 {strides = array<i32>} : memref<1x1x8x8x8xf32, #tpu.memory_space<vmem>>, vector<1x1x8x8x8xf32>,
    return
  }
  func.func @transform_0(%arg0: i32, %arg1: i32) -> (i32, i32, i32, i32, i32) {
    %c0_i32 = arith.constant 0 : i32
    %c0_i32_0 = arith.constant 0 : i32
    %c0_i32_1 = arith.constant 0 : i32
    %c0_i32_2 = arith.constant 0 : i32
    return %arg0, %arg1, %c0_i32, %c0_i32_0, %c0_i32_1 : i32, i32, i32, i32, i32
  }
  func.func @transform_1(%arg0: i32, %arg1: i32) -> (i32, i32, i32) {
    %c0_i32 = arith.constant 0 : i32
    %c0_i32_0 = arith.constant 0 : i32
    %c0_i32_1 = arith.constant 0 : i32
    %c0_i32_2 = arith.constant 0 : i32
    return %c0_i32, %c0_i32_0, %c0_i32_1 : i32, i32, i32
  }
  func.func @transform_2(%arg0: i32, %arg1: i32) -> (i32, i32, i32) {
    %c0_i32 = arith.constant 0 : i32
    %c0_i32_0 = arith.constant 0 : i32
    %c0_i32_1 = arith.constant 0 : i32
    %c0_i32_2 = arith.constant 0 : i32
    return %c0_i32, %c0_i32_0, %c0_i32_1 : i32, i32, i32
  }
  func.func @transform_3(%arg0: i32, %arg1: i32) -> (i32, i32, i32, i32, i32) {
    %c0_i32 = arith.constant 0 : i32
    %c0_i32_0 = arith.constant 0 : i32
    %c0_i32_1 = arith.constant 0 : i32
    %c0_i32_2 = arith.constant 0 : i32
    return %arg0, %arg1, %c0_i32, %c0_i32_0, %c0_i32_1 : i32, i32, i32, i32, i32
  }
}

</mosaic_0001>

<llo_original>
// kernel: downsample_conv.3
$region0: #{downsample_conv.3}
  #allocation0 [shape = 'u32[]', space=smem, size = 0x4, offset = 0x4, fixed_abs, tag = 'smem constant byte address 0x4 - core index']
  #allocation1 [shape = 'u32[144,128]{1,0:T(1,128)}', space=vmem, size = 0x12000, scoped, tag = 'internal scratch']
  %s0 = inlined_call_operand.vmem [shape: bf16[2,1,8,8,8], index: 0, kind: input, shape index: {}]
  %s1 = inlined_call_operand.vmem [shape: f32[1,1,8], index: 1, kind: input, shape index: {}]
  %s2 = inlined_call_operand.vmem [shape: f32[1,1,8], index: 2, kind: input, shape index: {}]
  %s3 = inlined_call_operand.vmem [shape: f32[2,1,8,8,8], index: 3, kind: output, shape index: {}]
  %s4 = sld [smem:[#allocation0]]
  $region45: #{downsample_conv.3} parent=0
    _
  %s6 = ssub.s32 1, %s4
  %s7 = scalar_select 0, %s6, %s4
  loop: start=0, step=1, limit=4
  $region2: #{downsample_conv.3} parent=0 // loop_pre_header
    _
  $region3: #{downsample_conv.3} parent=0 // loop_header
    %s9 = sphi 0, %s13
    %p10 = scmp.ge.s32.totalorder %s9, 4
    %s16 = sphi 0, %s28
    %s17 = sphi 0, %s24
    %s18 = sphi 0, %s16
    %s19 = sphi 0, %s17
    %s20 = sphi 0, %s18
    %s21 = sphi 0, %s19
    %s33 = sphi 0, %s35
    %s36 = sphi 0, %s33
    %s37 = sphi 0, %s36
    %s53 = sphi 0, %s37
    %s57 = sphi 0, %s57
    %s59 = sphi 0, %s57
    %s60 = sphi 0, %s59
    %s74 = sphi 0, %s60
    %s78 = sphi 0, %s78
    %s80 = sphi 0, %s78
    %s81 = sphi 0, %s80
    %s95 = sphi 0, %s81
    %s103 = sphi 0, %s105
    %s106 = sphi 0, %s103
    %s107 = sphi 0, %s106
    %s123 = sphi 0, %s107
  $region4: #{downsample_conv.3} parent=0 // loop_header_branch
    %12 = sbr.rel (%p10) target = $region8
  $region5: #{downsample_conv.3} parent=0 // loop_body
    %s14 = ssub.s32 %s9, 1
    %s15 = ssub.s32 %s9, 2
    %s22 = sadd.s32 1, %s17
    %p23 = scmp.ge.s32.totalorder %s22, 1
    %s24 = scalar_select %p23, 0, %s22
    %s25 = sadd.s32 1, %s16
    %s26 = scalar_select %p23, %s25, %s16
    %p27 = scmp.ge.s32.totalorder %s26, 2
    %s28 = scalar_select %p27, 0, %s26
    %s29 = ssub.s32 %s16, %s28
    %s30 = ssub.s32 %s17, %s24
    %s31 = sor.u32 %s29, %s30
    %p32 = scmp.eq.s32.totalorder %s31, 0
    %s34 = sadd.s32 %s33, 1
    %s35 = scalar_select %p32, %s33, %s34
    %p38 = pneg %p32
    %p39 = scmp.eq.s32.totalorder %s9, 1
    %p40 = por %p38, %p39
    %p41 = scmp.ne.s32.totalorder %s33, %s36
    %p42 = scmp.eq.s32.totalorder %s9, 0
    %p43 = por %p41, %p42
    %p44 = scmp.ne.s32.totalorder %s33, %s36
    %p45 = scmp.eq.s32.totalorder %s14, 1
    %p46 = por %p44, %p45
    %p47 = scmp.ne.s32.totalorder %s36, %s37
    %p48 = scmp.eq.s32.totalorder %s14, 0
    %p49 = por %p47, %p48
    %p50 = scmp.ne.s32.totalorder %s36, %s37
    %p51 = scmp.eq.s32.totalorder %s15, 1
    %p52 = por %p50, %p51
    %p54 = scmp.ne.s32.totalorder %s37, %s53
    %p55 = scmp.eq.s32.totalorder %s15, 0
    %p56 = por %p54, %p55
    %s58 = sadd.s32 %s57, 1
    %p61 = scmp.eq.s32.totalorder %s9, 1
    %p62 = scmp.ne.s32.totalorder %s57, %s59
    %p63 = scmp.eq.s32.totalorder %s9, 0
    %p64 = por %p62, %p63
    %p65 = scmp.ne.s32.totalorder %s57, %s59
    %p66 = scmp.eq.s32.totalorder %s14, 1
    %p67 = por %p65, %p66
    %p68 = scmp.ne.s32.totalorder %s59, %s60
    %p69 = scmp.eq.s32.totalorder %s14, 0
    %p70 = por %p68, %p69
    %p71 = scmp.ne.s32.totalorder %s59, %s60
    %p72 = scmp.eq.s32.totalorder %s15, 1
    %p73 = por %p71, %p72
    %p75 = scmp.ne.s32.totalorder %s60, %s74
    %p76 = scmp.eq.s32.totalorder %s15, 0
    %p77 = por %p75, %p76
    %s79 = sadd.s32 %s78, 1
    %p82 = scmp.eq.s32.totalorder %s9, 1
    %p83 = scmp.ne.s32.totalorder %s78, %s80
    %p84 = scmp.eq.s32.totalorder %s9, 0
    %p85 = por %p83, %p84
    %p86 = scmp.ne.s32.totalorder %s78, %s80
    %p87 = scmp.eq.s32.totalorder %s14, 1
    %p88 = por %p86, %p87
    %p89 = scmp.ne.s32.totalorder %s80, %s81
    %p90 = scmp.eq.s32.totalorder %s14, 0
    %p91 = por %p89, %p90
    %p92 = scmp.ne.s32.totalorder %s80, %s81
    %p93 = scmp.eq.s32.totalorder %s15, 1
    %p94 = por %p92, %p93
    %p96 = scmp.ne.s32.totalorder %s81, %s95
    %p97 = scmp.eq.s32.totalorder %s15, 0
    %p98 = por %p96, %p97
    %s99 = ssub.s32 %s16, %s28
    %s100 = ssub.s32 %s17, %s24
    %s101 = sor.u32 %s99, %s100
    %p102 = scmp.eq.s32.totalorder %s101, 0
    %s104 = sadd.s32 %s103, 1
    %s105 = scalar_select %p102, %s103, %s104
    %p108 = pneg %p102
    %p109 = scmp.eq.s32.totalorder %s9, 1
    %p110 = por %p108, %p109
    %p111 = scmp.ne.s32.totalorder %s103, %s106
    %p112 = scmp.eq.s32.totalorder %s9, 0
    %p113 = por %p111, %p112
    %p114 = scmp.ne.s32.totalorder %s103, %s106
    %p115 = scmp.eq.s32.totalorder %s14, 1
    %p116 = por %p114, %p115
    %p117 = scmp.ne.s32.totalorder %s106, %s107
    %p118 = scmp.eq.s32.totalorder %s14, 0
    %p119 = por %p117, %p118
    %p120 = scmp.ne.s32.totalorder %s106, %s107
    %p121 = scmp.eq.s32.totalorder %s15, 1
    %p122 = por %p120, %p121
    %p124 = scmp.ne.s32.totalorder %s107, %s123
    %p125 = scmp.eq.s32.totalorder %s15, 0
    %p126 = por %p124, %p125
    %p127 = scmp.le.s32.totalorder 1, %s9
    %p128 = scmp.lt.s32.totalorder %s9, 3
    %p129 = pnand %p127, %p128
    %p130 = pneg %p129
    // Predicated region
    $region9: #{downsample_conv.3} parent=5 // pred_check
      _
    $region10: #{downsample_conv.3} parent=5 // pred_check_branch
      %132 = sbr.rel (%p129) target = $region12
    $region11: #{downsample_conv.3} parent=5 // pred_region
      %s133 = ssub.s32 %s9, 1
      // Predicated region
      $region13: #{downsample_conv.3} parent=11 // pred_check
        %p134 = pneg %p70
      $region14: #{downsample_conv.3} parent=11 // pred_check_branch
        %136 = sbr.rel (%p134) target = $region16
      $region15: #{downsample_conv.3} parent=11 // pred_region
        _
      $region16: #{downsample_conv.3} parent=11 // pred_fallthru
        _
      // Predicated region
      $region17: #{downsample_conv.3} parent=11 // pred_check
        %p137 = pneg %p91
      $region18: #{downsample_conv.3} parent=11 // pred_check_branch
        %139 = sbr.rel (%p137) target = $region20
      $region19: #{downsample_conv.3} parent=11 // pred_region
        _
      $region20: #{downsample_conv.3} parent=11 // pred_fallthru
        _
    $region12: #{downsample_conv.3} parent=5 // pred_fallthru
      _
    %p140 = scmp.lt.s32.totalorder %s9, 2
    // Predicated region
    $region21: #{downsample_conv.3} parent=5 // pred_check
      %p141 = pneg %p140
    $region22: #{downsample_conv.3} parent=5 // pred_check_branch
      %143 = sbr.rel (%p141) target = $region24
    $region23: #{downsample_conv.3} parent=5 // pred_region
      // Predicated region
      $region25: #{downsample_conv.3} parent=23 // pred_check
        %p144 = pneg %p43
      $region26: #{downsample_conv.3} parent=23 // pred_check_branch
        %146 = sbr.rel (%p144) target = $region28
      $region27: #{downsample_conv.3} parent=23 // pred_region
        %p147 = scmp.lt.s32.totalorder %s16, 1
        %s148 = scalar_select %p147, %s16, 1
        %p149 = scmp.lt.s32.totalorder %s17, 0
        %s150 = scalar_select %p149, %s17, 0
        %s151 = smul.addr %s150, 8
        %s152 = smul.addr %s148, 8
        %s153 = sadd.s32 %s151, %s152
        %s154 = smul.addr %s153, 4
        %s155 = scalar_lea.vmem %s0, %s154
      $region28: #{downsample_conv.3} parent=23 // pred_fallthru
        _
    $region24: #{downsample_conv.3} parent=5 // pred_fallthru
      _
    %p156 = scmp.le.s32.totalorder 1, %s9
    %p157 = scmp.lt.s32.totalorder %s9, 3
    %p158 = pnand %p156, %p157
    %p159 = pneg %p158
    // Predicated region
    $region29: #{downsample_conv.3} parent=5 // pred_check
      _
    $region30: #{downsample_conv.3} parent=5 // pred_check_branch
      %161 = sbr.rel (%p158) target = $region32
    $region31: #{downsample_conv.3} parent=5 // pred_region
      %s162 = ssub.s32 %s9, 1
      %p163 = scmp.lt.s32.totalorder %s18, 1
      %s164 = scalar_select %p163, %s18, 1
      %p165 = scmp.lt.s32.totalorder %s19, 0
      %s166 = scalar_select %p165, %s19, 0
      %s167 = smul.addr %s166, 8
      %s168 = smul.addr %s164, 8
      %s169 = sadd.s32 %s167, %s168
      %s170 = smul.addr %s169, 4
      %s171 = scalar_lea.vmem %s0, %s170
      %p172 = pneg %p49
      %p173 = pneg %p46
      %p174 = pneg %p70
      %p175 = pneg %p67
      %p176 = pneg %p91
      %p177 = pneg %p88
      %p178 = pneg %p119
      %p179 = pneg %p116
      %p180 = scmp.lt.s32.totalorder %s18, 1
      %s181 = scalar_select %p180, %s18, 1
      %p182 = scmp.lt.s32.totalorder %s19, 0
      %s183 = scalar_select %p182, %s19, 0
      %s184 = smul.addr %s183, 8
      %s185 = smul.addr %s181, 8
      %s186 = sadd.s32 %s184, %s185
      %s187 = smul.addr %s186, 8
      %s188 = scalar_lea.vmem %s3, %s187
      %p189 = scmp.lt.s32.totalorder %s18, 1
      %s190 = scalar_select %p189, %s18, 1
      %p191 = scmp.lt.s32.totalorder %s19, 0
      %s192 = scalar_select %p191, %s19, 0
      %s193 = smul.addr %s192, 8
      %s194 = smul.addr %s190, 8
      %s195 = sadd.s32 %s193, %s194
      %s196 = smul.addr %s195, 4
      %s197 = scalar_lea.vmem %s0, %s196
      %p198 = scmp.lt.s32.totalorder %s18, 1
      %s199 = scalar_select %p198, %s18, 1
      %p200 = scmp.lt.s32.totalorder %s19, 0
      %s201 = scalar_select %p200, %s19, 0
      %s202 = smul.addr %s201, 8
      %s203 = smul.addr %s199, 8
      %s204 = sadd.s32 %s202, %s203
      %s205 = smul.addr %s204, 8
      %s206 = scalar_lea.vmem %s3, %s205
      %v207 = vld [vmem:[%s197] sm:$0xf]
      %v208 = vld [vmem:[%s197 + $0x4] sm:$0xf]
      %v209 = vld [vmem:[%s197 + $0x8] sm:$0xf]
      %v210 = vld [vmem:[%s197 + $0xc] sm:$0xf]
      %v211 = vld [vmem:[%s197 + $0x10] sm:$0xf]
      %v212 = vld [vmem:[%s197 + $0x14] sm:$0xf]
      %v213 = vld [vmem:[%s197 + $0x18] sm:$0xf]
      %v214 = vld [vmem:[%s197 + $0x1c] sm:$0xf]
      %v215 = vunpack.c.l.bf16 %v207
      %v216 = vunpack.c.l.bf16 %v208
      %v217 = vunpack.c.l.bf16 %v209
      %v218 = vunpack.c.l.bf16 %v210
      %v219 = vunpack.c.l.bf16 %v211
      %v220 = vunpack.c.l.bf16 %v212
      %v221 = vunpack.c.l.bf16 %v213
      %v222 = vunpack.c.l.bf16 %v214
      %v223 = vld [vmem:[%s1] sm:$0x1]
      %v225 = vlaneseq
      %v226 = vshrl.u32 %v225, 7
      %v227 = vsub.s32 0, %v226
      %v228 = vrot.slane %v223, %v227
      %v230 = vmul.f32 %v215, %v228
      %v231 = vmul.f32 %v216, %v228
      %v232 = vmul.f32 %v217, %v228
      %v233 = vmul.f32 %v218, %v228
      %v234 = vmul.f32 %v219, %v228
      %v235 = vmul.f32 %v220, %v228
      %v236 = vmul.f32 %v221, %v228
      %v237 = vmul.f32 %v222, %v228
      %v238 = vld [vmem:[%s2] sm:$0x1]
      %v240 = vlaneseq
      %v241 = vshrl.u32 %v240, 7
      %v242 = vsub.s32 0, %v241
      %v243 = vrot.slane %v238, %v242
      %v245 = vadd.f32 %v230, %v243
      %v246 = vadd.f32 %v231, %v243
      %v247 = vadd.f32 %v232, %v243
      %v248 = vadd.f32 %v233, %v243
      %v249 = vadd.f32 %v234, %v243
      %v250 = vadd.f32 %v235, %v243
      %v251 = vadd.f32 %v236, %v243
      %v252 = vadd.f32 %v237, %v243
      %vm253 = vcmp.gt.f32.partialorder %v245, 0.0
      %vm254 = vcmp.gt.f32.partialorder %v246, 0.0
      %vm255 = vcmp.gt.f32.partialorder %v247, 0.0
      %vm256 = vcmp.gt.f32.partialorder %v248, 0.0
      %vm257 = vcmp.gt.f32.partialorder %v249, 0.0
      %vm258 = vcmp.gt.f32.partialorder %v250, 0.0
      %vm259 = vcmp.gt.f32.partialorder %v251, 0.0
      %vm260 = vcmp.gt.f32.partialorder %v252, 0.0
      %v261 = vmul.f32 %v245, 0.2
      %v262 = vmul.f32 %v246, 0.2
      %v263 = vmul.f32 %v247, 0.2
      %v264 = vmul.f32 %v248, 0.2
      %v265 = vmul.f32 %v249, 0.2
      %v266 = vmul.f32 %v250, 0.2
      %v267 = vmul.f32 %v251, 0.2
      %v268 = vmul.f32 %v252, 0.2
      %v269 = vsel %vm253, %v245, %v261
      %v270 = vsel %vm254, %v246, %v262
      %v271 = vsel %vm255, %v247, %v263
      %v272 = vsel %vm256, %v248, %v264
      %v273 = vsel %vm257, %v249, %v265
      %v274 = vsel %vm258, %v250, %v266
      %v275 = vsel %vm259, %v251, %v267
      %v276 = vsel %vm260, %v252, %v268
      %vm277 = vcmask 64512
      %278 = vst.msk [vmem:[%s206] sm:$0xff] %vm277, %v269
      %279 = vst.msk [vmem:[%s206 + $0x8] sm:$0xff] %vm277, %v270
      %280 = vst.msk [vmem:[%s206 + $0x10] sm:$0xff] %vm277, %v271
      %281 = vst.msk [vmem:[%s206 + $0x18] sm:$0xff] %vm277, %v272
      %282 = vst.msk [vmem:[%s206 + $0x20] sm:$0xff] %vm277, %v273
      %283 = vst.msk [vmem:[%s206 + $0x28] sm:$0xff] %vm277, %v274
      %284 = vst.msk [vmem:[%s206 + $0x30] sm:$0xff] %vm277, %v275
      %285 = vst.msk [vmem:[%s206 + $0x38] sm:$0xff] %vm277, %v276
      %p286 = scmp.lt.s32.totalorder %s18, 1
      %s287 = scalar_select %p286, %s18, 1
      %p288 = scmp.lt.s32.totalorder %s19, 0
      %s289 = scalar_select %p288, %s19, 0
      %s290 = smul.addr %s289, 8
      %s291 = smul.addr %s287, 8
      %s292 = sadd.s32 %s290, %s291
      %s293 = smul.addr %s292, 8
      %s294 = scalar_lea.vmem %s3, %s293
      // Predicated region
      $region33: #{downsample_conv.3} parent=31 // pred_check
        %p295 = pneg %p116
      $region34: #{downsample_conv.3} parent=31 // pred_check_branch
        %297 = sbr.rel (%p295) target = $region36
      $region35: #{downsample_conv.3} parent=31 // pred_region
        _
      $region36: #{downsample_conv.3} parent=31 // pred_fallthru
        _
    $region32: #{downsample_conv.3} parent=5 // pred_fallthru
      _
    %p298 = scmp.le.s32.totalorder 2, %s9
    // Predicated region
    $region37: #{downsample_conv.3} parent=5 // pred_check
      %p299 = pneg %p298
    $region38: #{downsample_conv.3} parent=5 // pred_check_branch
      %301 = sbr.rel (%p299) target = $region40
    $region39: #{downsample_conv.3} parent=5 // pred_region
      %s302 = ssub.s32 %s9, 2
      // Predicated region
      $region41: #{downsample_conv.3} parent=39 // pred_check
        %p303 = pneg %p122
      $region42: #{downsample_conv.3} parent=39 // pred_check_branch
        %305 = sbr.rel (%p303) target = $region44
      $region43: #{downsample_conv.3} parent=39 // pred_region
        %p306 = scmp.lt.s32.totalorder %s20, 1
        %s307 = scalar_select %p306, %s20, 1
        %p308 = scmp.lt.s32.totalorder %s21, 0
        %s309 = scalar_select %p308, %s21, 0
        %s310 = smul.addr %s309, 8
        %s311 = smul.addr %s307, 8
        %s312 = sadd.s32 %s310, %s311
        %s313 = smul.addr %s312, 8
        %s314 = scalar_lea.vmem %s3, %s313
      $region44: #{downsample_conv.3} parent=39 // pred_fallthru
        _
    $region40: #{downsample_conv.3} parent=5 // pred_fallthru
      _
  $region6: #{downsample_conv.3} parent=0 // loop_footer
    %s13 = sadd.s32 1, %s9
  $region7: #{downsample_conv.3} parent=0 // loop_footer_branch
    %8 = sbr.rel target = $region3
  $region8: #{downsample_conv.3} parent=0 // loop_exit
    _

// kernel: downsample_conv.2
$region0: #{downsample_conv.2}
  #allocation0 [shape = 'u32[]', space=smem, size = 0x4, offset = 0x4, fixed_abs, tag = 'smem constant byte address 0x4 - core index']
  #allocation1 [shape = 'u32[144,128]{1,0:T(1,128)}', space=vmem, size = 0x12000, scoped, tag = 'internal scratch']
  %s0 = inlined_call_operand.vmem [shape: bf16[2,1,81,16], index: 0, kind: input, shape index: {}]
  %s1 = inlined_call_operand.vmem [shape: bf16[4,16,8], index: 1, kind: input, shape index: {}]
  %s2 = inlined_call_operand.vmem [shape: f32[71,1], index: 2, kind: input, shape index: {}]
  %s3 = inlined_call_operand.vmem [shape: bf16[2,1,8,8,8], index: 3, kind: output, shape index: {0}]
  %s4 = inlined_call_operand.vmem [shape: f32[2,1,1,8], index: 4, kind: output, shape index: {1}]
  %s5 = inlined_call_operand.vmem [shape: f32[2,1,1,8], index: 5, kind: output, shape index: {2}]
  %6 = xla_tuple %s3, %s4, %s5
  %s7 = sld [smem:[#allocation0]]
  $region61: #{downsample_conv.2} parent=0
    _
  %s9 = ssub.s32 1, %s7
  %s10 = scalar_select 0, %s9, %s7
  loop: start=0, step=1, limit=4
  $region2: #{downsample_conv.2} parent=0 // loop_pre_header
    _
  $region3: #{downsample_conv.2} parent=0 // loop_header
    %s12 = sphi 0, %s16
    %p13 = scmp.ge.s32.totalorder %s12, 4
    %s19 = sphi 0, %s31
    %s20 = sphi 0, %s27
    %s21 = sphi 0, %s19
    %s22 = sphi 0, %s20
    %s23 = sphi 0, %s21
    %s24 = sphi 0, %s22
    %s36 = sphi 0, %s38
    %s39 = sphi 0, %s36
    %s40 = sphi 0, %s39
    %s56 = sphi 0, %s40
    %s60 = sphi 0, %s60
    %s62 = sphi 0, %s60
    %s63 = sphi 0, %s62
    %s77 = sphi 0, %s63
    %s81 = sphi 0, %s81
    %s83 = sphi 0, %s81
    %s84 = sphi 0, %s83
    %s98 = sphi 0, %s84
    %s106 = sphi 0, %s108
    %s109 = sphi 0, %s106
    %s110 = sphi 0, %s109
    %s126 = sphi 0, %s110
    %s134 = sphi 0, %s136
    %s137 = sphi 0, %s134
    %s138 = sphi 0, %s137
    %s154 = sphi 0, %s138
    %s162 = sphi 0, %s164
    %s165 = sphi 0, %s162
    %s166 = sphi 0, %s165
    %s182 = sphi 0, %s166
  $region4: #{downsample_conv.2} parent=0 // loop_header_branch
    %15 = sbr.rel (%p13) target = $region8
  $region5: #{downsample_conv.2} parent=0 // loop_body
    %s17 = ssub.s32 %s12, 1
    %s18 = ssub.s32 %s12, 2
    %s25 = sadd.s32 1, %s20
    %p26 = scmp.ge.s32.totalorder %s25, 1
    %s27 = scalar_select %p26, 0, %s25
    %s28 = sadd.s32 1, %s19
    %s29 = scalar_select %p26, %s28, %s19
    %p30 = scmp.ge.s32.totalorder %s29, 2
    %s31 = scalar_select %p30, 0, %s29
    %s32 = ssub.s32 %s19, %s31
    %s33 = ssub.s32 %s20, %s27
    %s34 = sor.u32 %s32, %s33
    %p35 = scmp.eq.s32.totalorder %s34, 0
    %s37 = sadd.s32 %s36, 1
    %s38 = scalar_select %p35, %s36, %s37
    %p41 = pneg %p35
    %p42 = scmp.eq.s32.totalorder %s12, 1
    %p43 = por %p41, %p42
    %p44 = scmp.ne.s32.totalorder %s36, %s39
    %p45 = scmp.eq.s32.totalorder %s12, 0
    %p46 = por %p44, %p45
    %p47 = scmp.ne.s32.totalorder %s36, %s39
    %p48 = scmp.eq.s32.totalorder %s17, 1
    %p49 = por %p47, %p48
    %p50 = scmp.ne.s32.totalorder %s39, %s40
    %p51 = scmp.eq.s32.totalorder %s17, 0
    %p52 = por %p50, %p51
    %p53 = scmp.ne.s32.totalorder %s39, %s40
    %p54 = scmp.eq.s32.totalorder %s18, 1
    %p55 = por %p53, %p54
    %p57 = scmp.ne.s32.totalorder %s40, %s56
    %p58 = scmp.eq.s32.totalorder %s18, 0
    %p59 = por %p57, %p58
    %s61 = sadd.s32 %s60, 1
    %p64 = scmp.eq.s32.totalorder %s12, 1
    %p65 = scmp.ne.s32.totalorder %s60, %s62
    %p66 = scmp.eq.s32.totalorder %s12, 0
    %p67 = por %p65, %p66
    %p68 = scmp.ne.s32.totalorder %s60, %s62
    %p69 = scmp.eq.s32.totalorder %s17, 1
    %p70 = por %p68, %p69
    %p71 = scmp.ne.s32.totalorder %s62, %s63
    %p72 = scmp.eq.s32.totalorder %s17, 0
    %p73 = por %p71, %p72
    %p74 = scmp.ne.s32.totalorder %s62, %s63
    %p75 = scmp.eq.s32.totalorder %s18, 1
    %p76 = por %p74, %p75
    %p78 = scmp.ne.s32.totalorder %s63, %s77
    %p79 = scmp.eq.s32.totalorder %s18, 0
    %p80 = por %p78, %p79
    %s82 = sadd.s32 %s81, 1
    %p85 = scmp.eq.s32.totalorder %s12, 1
    %p86 = scmp.ne.s32.totalorder %s81, %s83
    %p87 = scmp.eq.s32.totalorder %s12, 0
    %p88 = por %p86, %p87
    %p89 = scmp.ne.s32.totalorder %s81, %s83
    %p90 = scmp.eq.s32.totalorder %s17, 1
    %p91 = por %p89, %p90
    %p92 = scmp.ne.s32.totalorder %s83, %s84
    %p93 = scmp.eq.s32.totalorder %s17, 0
    %p94 = por %p92, %p93
    %p95 = scmp.ne.s32.totalorder %s83, %s84
    %p96 = scmp.eq.s32.totalorder %s18, 1
    %p97 = por %p95, %p96
    %p99 = scmp.ne.s32.totalorder %s84, %s98
    %p100 = scmp.eq.s32.totalorder %s18, 0
    %p101 = por %p99, %p100
    %s102 = ssub.s32 %s19, %s31
    %s103 = ssub.s32 %s20, %s27
    %s104 = sor.u32 %s102, %s103
    %p105 = scmp.eq.s32.totalorder %s104, 0
    %s107 = sadd.s32 %s106, 1
    %s108 = scalar_select %p105, %s106, %s107
    %p111 = pneg %p105
    %p112 = scmp.eq.s32.totalorder %s12, 1
    %p113 = por %p111, %p112
    %p114 = scmp.ne.s32.totalorder %s106, %s109
    %p115 = scmp.eq.s32.totalorder %s12, 0
    %p116 = por %p114, %p115
    %p117 = scmp.ne.s32.totalorder %s106, %s109
    %p118 = scmp.eq.s32.totalorder %s17, 1
    %p119 = por %p117, %p118
    %p120 = scmp.ne.s32.totalorder %s109, %s110
    %p121 = scmp.eq.s32.totalorder %s17, 0
    %p122 = por %p120, %p121
    %p123 = scmp.ne.s32.totalorder %s109, %s110
    %p124 = scmp.eq.s32.totalorder %s18, 1
    %p125 = por %p123, %p124
    %p127 = scmp.ne.s32.totalorder %s110, %s126
    %p128 = scmp.eq.s32.totalorder %s18, 0
    %p129 = por %p127, %p128
    %s130 = ssub.s32 %s19, %s31
    %s131 = ssub.s32 %s20, %s27
    %s132 = sor.u32 %s130, %s131
    %p133 = scmp.eq.s32.totalorder %s132, 0
    %s135 = sadd.s32 %s134, 1
    %s136 = scalar_select %p133, %s134, %s135
    %p139 = pneg %p133
    %p140 = scmp.eq.s32.totalorder %s12, 1
    %p141 = por %p139, %p140
    %p142 = scmp.ne.s32.totalorder %s134, %s137
    %p143 = scmp.eq.s32.totalorder %s12, 0
    %p144 = por %p142, %p143
    %p145 = scmp.ne.s32.totalorder %s134, %s137
    %p146 = scmp.eq.s32.totalorder %s17, 1
    %p147 = por %p145, %p146
    %p148 = scmp.ne.s32.totalorder %s137, %s138
    %p149 = scmp.eq.s32.totalorder %s17, 0
    %p150 = por %p148, %p149
    %p151 = scmp.ne.s32.totalorder %s137, %s138
    %p152 = scmp.eq.s32.totalorder %s18, 1
    %p153 = por %p151, %p152
    %p155 = scmp.ne.s32.totalorder %s138, %s154
    %p156 = scmp.eq.s32.totalorder %s18, 0
    %p157 = por %p155, %p156
    %s158 = ssub.s32 %s19, %s31
    %s159 = ssub.s32 %s20, %s27
    %s160 = sor.u32 %s158, %s159
    %p161 = scmp.eq.s32.totalorder %s160, 0
    %s163 = sadd.s32 %s162, 1
    %s164 = scalar_select %p161, %s162, %s163
    %p167 = pneg %p161
    %p168 = scmp.eq.s32.totalorder %s12, 1
    %p169 = por %p167, %p168
    %p170 = scmp.ne.s32.totalorder %s162, %s165
    %p171 = scmp.eq.s32.totalorder %s12, 0
    %p172 = por %p170, %p171
    %p173 = scmp.ne.s32.totalorder %s162, %s165
    %p174 = scmp.eq.s32.totalorder %s17, 1
    %p175 = por %p173, %p174
    %p176 = scmp.ne.s32.totalorder %s165, %s166
    %p177 = scmp.eq.s32.totalorder %s17, 0
    %p178 = por %p176, %p177
    %p179 = scmp.ne.s32.totalorder %s165, %s166
    %p180 = scmp.eq.s32.totalorder %s18, 1
    %p181 = por %p179, %p180
    %p183 = scmp.ne.s32.totalorder %s166, %s182
    %p184 = scmp.eq.s32.totalorder %s18, 0
    %p185 = por %p183, %p184
    %p186 = scmp.le.s32.totalorder 1, %s12
    %p187 = scmp.lt.s32.totalorder %s12, 3
    %p188 = pnand %p186, %p187
    %p189 = pneg %p188
    // Predicated region
    $region9: #{downsample_conv.2} parent=5 // pred_check
      _
    $region10: #{downsample_conv.2} parent=5 // pred_check_branch
      %191 = sbr.rel (%p188) target = $region12
    $region11: #{downsample_conv.2} parent=5 // pred_region
      %s192 = ssub.s32 %s12, 1
      // Predicated region
      $region13: #{downsample_conv.2} parent=11 // pred_check
        %p193 = pneg %p73
      $region14: #{downsample_conv.2} parent=11 // pred_check_branch
        %195 = sbr.rel (%p193) target = $region16
      $region15: #{downsample_conv.2} parent=11 // pred_region
        _
      $region16: #{downsample_conv.2} parent=11 // pred_fallthru
        _
      // Predicated region
      $region17: #{downsample_conv.2} parent=11 // pred_check
        %p196 = pneg %p94
      $region18: #{downsample_conv.2} parent=11 // pred_check_branch
        %198 = sbr.rel (%p196) target = $region20
      $region19: #{downsample_conv.2} parent=11 // pred_region
        _
      $region20: #{downsample_conv.2} parent=11 // pred_fallthru
        _
    $region12: #{downsample_conv.2} parent=5 // pred_fallthru
      _
    %p199 = scmp.lt.s32.totalorder %s12, 2
    // Predicated region
    $region21: #{downsample_conv.2} parent=5 // pred_check
      %p200 = pneg %p199
    $region22: #{downsample_conv.2} parent=5 // pred_check_branch
      %202 = sbr.rel (%p200) target = $region24
    $region23: #{downsample_conv.2} parent=5 // pred_region
      // Predicated region
      $region25: #{downsample_conv.2} parent=23 // pred_check
        %p203 = pneg %p46
      $region26: #{downsample_conv.2} parent=23 // pred_check_branch
        %205 = sbr.rel (%p203) target = $region28
      $region27: #{downsample_conv.2} parent=23 // pred_region
        %p206 = scmp.lt.s32.totalorder %s19, 1
        %s207 = scalar_select %p206, %s19, 1
        %p208 = scmp.lt.s32.totalorder %s20, 0
        %s209 = scalar_select %p208, %s20, 0
        %s210 = smul.addr %s209, 11
        %s211 = smul.addr %s207, 11
        %s212 = sadd.s32 %s210, %s211
        %s213 = smul.addr %s212, 4
        %s214 = scalar_lea.vmem %s0, %s213
      $region28: #{downsample_conv.2} parent=23 // pred_fallthru
        _
    $region24: #{downsample_conv.2} parent=5 // pred_fallthru
      _
    %p215 = scmp.le.s32.totalorder 1, %s12
    %p216 = scmp.lt.s32.totalorder %s12, 3
    %p217 = pnand %p215, %p216
    %p218 = pneg %p217
    // Predicated region
    $region29: #{downsample_conv.2} parent=5 // pred_check
      _
    $region30: #{downsample_conv.2} parent=5 // pred_check_branch
      %220 = sbr.rel (%p217) target = $region32
    $region31: #{downsample_conv.2} parent=5 // pred_region
      %s221 = ssub.s32 %s12, 1
      %p222 = scmp.lt.s32.totalorder %s21, 1
      %s223 = scalar_select %p222, %s21, 1
      %p224 = scmp.lt.s32.totalorder %s22, 0
      %s225 = scalar_select %p224, %s22, 0
      %s226 = smul.addr %s225, 11
      %s227 = smul.addr %s223, 11
      %s228 = sadd.s32 %s226, %s227
      %s229 = smul.addr %s228, 4
      %s230 = scalar_lea.vmem %s0, %s229
      %p231 = pneg %p52
      %p232 = pneg %p49
      %p233 = pneg %p73
      %p234 = pneg %p70
      %p235 = pneg %p94
      %p236 = pneg %p91
      %p237 = pneg %p122
      %p238 = pneg %p119
      %p239 = scmp.lt.s32.totalorder %s21, 1
      %s240 = scalar_select %p239, %s21, 1
      %p241 = scmp.lt.s32.totalorder %s22, 0
      %s242 = scalar_select %p241, %s22, 0
      %s243 = smul.addr %s242, 8
      %s244 = smul.addr %s240, 8
      %s245 = sadd.s32 %s243, %s244
      %s246 = smul.addr %s245, 4
      %s247 = scalar_lea.vmem %s3, %s246
      %p248 = pneg %p150
      %p249 = pneg %p147
      %p250 = scmp.lt.s32.totalorder %s21, 1
      %s251 = scalar_select %p250, %s21, 1
      %p252 = scmp.lt.s32.totalorder %s22, 0
      %s253 = scalar_select %p252, %s22, 0
      %s254 = sadd.s32 %s253, %s251
      %s255 = scalar_lea.vmem %s4, %s254
      %p256 = pneg %p178
      %p257 = pneg %p175
      %p258 = scmp.lt.s32.totalorder %s21, 1
      %s259 = scalar_select %p258, %s21, 1
      %p260 = scmp.lt.s32.totalorder %s22, 0
      %s261 = scalar_select %p260, %s22, 0
      %s262 = sadd.s32 %s261, %s259
      %s263 = scalar_lea.vmem %s5, %s262
      %p264 = scmp.lt.s32.totalorder %s21, 1
      %s265 = scalar_select %p264, %s21, 1
      %p266 = scmp.lt.s32.totalorder %s22, 0
      %s267 = scalar_select %p266, %s22, 0
      %s268 = smul.addr %s267, 11
      %s269 = smul.addr %s265, 11
      %s270 = sadd.s32 %s268, %s269
      %s271 = smul.addr %s270, 4
      %s272 = scalar_lea.vmem %s0, %s271
      %p273 = scmp.lt.s32.totalorder %s21, 1
      %s274 = scalar_select %p273, %s21, 1
      %p275 = scmp.lt.s32.totalorder %s22, 0
      %s276 = scalar_select %p275, %s22, 0
      %s277 = smul.addr %s276, 8
      %s278 = smul.addr %s274, 8
      %s279 = sadd.s32 %s277, %s278
      %s280 = smul.addr %s279, 4
      %s281 = scalar_lea.vmem %s3, %s280
      %p282 = scmp.lt.s32.totalorder %s21, 1
      %s283 = scalar_select %p282, %s21, 1
      %p284 = scmp.lt.s32.totalorder %s22, 0
      %s285 = scalar_select %p284, %s22, 0
      %s286 = sadd.s32 %s285, %s283
      %s287 = scalar_lea.vmem %s4, %s286
      %p288 = scmp.lt.s32.totalorder %s21, 1
      %s289 = scalar_select %p288, %s21, 1
      %p290 = scmp.lt.s32.totalorder %s22, 0
      %s291 = scalar_select %p290, %s22, 0
      %s292 = sadd.s32 %s291, %s289
      %s293 = scalar_lea.vmem %s5, %s292
      %v295 = vld [vmem:[%s272] sm:$0xf]
      %v296 = vld [vmem:[%s272 + $0x4] sm:$0xf]
      %v297 = vld [vmem:[%s272 + $0x8] sm:$0xf]
      %v298 = vld [vmem:[%s272 + $0xc] sm:$0xf]
      %v299 = vld [vmem:[%s272 + $0x10] sm:$0xf]
      %v300 = vld [vmem:[%s272 + $0x14] sm:$0xf]
      %v301 = vld [vmem:[%s272 + $0x18] sm:$0xf]
      %v302 = vld [vmem:[%s272 + $0x1c] sm:$0xf]
      %v303 = vld [vmem:[%s272 + $0x20] sm:$0xf]
      %v304 = vld [vmem:[%s1] sm:$0xf]
      %v305 = vld [vmem:[%s1 + $0x4] sm:$0xf]
      %s306 = scalar_lea.vmem %s1, 8
      %v307 = vld [vmem:[%s306] sm:$0xf]
      %v308 = vld [vmem:[%s306 + $0x4] sm:$0xf]
      %v318 = vunpack.c.l.b16 %v295
      %v319 = vunpack.c.l.b16 %v296
      %v320 = vunpack.c.l.b16 %v297
      %v321 = vunpack.c.l.b16 %v298
      %v322 = vunpack.c.l.b16 %v299
      %v323 = vunpack.c.l.b16 %v300
      %v324 = vunpack.c.l.b16 %v301
      %v325 = vunpack.c.l.b16 %v302
      %v326 = vunpack.c.l.b16 %v303
      %v327 = vpack.c.b16 %v319, %v318
      %v328 = vpack.c.b16 %v321, %v320
      %v329 = vpack.c.b16 %v323, %v322
      %v330 = vpack.c.b16 %v325, %v324
      %v331 = vpack.c.b16 %v326, %v326
      %vm332 = vsmask.f32 7424
      %v334 = vshrl.u32 %v327, 16
      %v336 = vshll.u32 %v327, 16
      %v338 = vrot.slane %v336, 1
      %v339 = vor.u32 %v334, %v338
      %v341 = vshll.u32 %v328, 16
      %v343 = vrot.slane %v341, 1
      %v344 = vsel %vm332, %v339, %v343
      %v345 = vshrl.u32 %v328, 16
      %v347 = vor.u32 %v345, %v343
      %v349 = vshll.u32 %v329, 16
      %v351 = vrot.slane %v349, 1
      %v352 = vsel %vm332, %v347, %v351
      %v353 = vshrl.u32 %v329, 16
      %v355 = vor.u32 %v353, %v351
      %v357 = vshll.u32 %v330, 16
      %v359 = vrot.slane %v357, 1
      %v360 = vsel %vm332, %v355, %v359
      %v361 = vshrl.u32 %v330, 16
      %v363 = vor.u32 %v361, %v359
      %v365 = vshll.u32 %v331, 16
      %v367 = vrot.slane %v365, 1
      %v368 = vsel %vm332, %v363, %v367
      %v369 = vshrl.u32 %v331, 16
      %v371 = vor.u32 %v369, %v367
      %v374 = vunpack.c.l.b16 %v307
      %v375 = vunpack.c.l.b16 %v308
      %v376 = vpack.c.b16 %v375, %v374
      %vm378 = vcmask 130048
      %v380 = vsel %vm378, %v344, 0
      %v383 = vsel %vm378, %v352, 0
      %v386 = vsel %vm378, %v360, 0
      %v389 = vsel %vm378, %v368, 0
      %v392 = vsel %vm378, %v371, 0
      %394 = vmatprep.subr.bf16.mxu0 0
      %395 = vmatpush1.bf16.msra.mxu0 %v376
      %396 = vmatprep.subr.bf16.mxu0 0
      %397 = vmatpush1.bf16.msra.mxu0 0
      %398 = vmatprep.subr.bf16.mxu0 0
      %399 = vmatpush1.bf16.msra.mxu0 0
      %400 = vmatprep.subr.bf16.mxu0 0
      %401 = vmatpush1.bf16.msra.mxu0 0
      %402 = vmatprep.subr.bf16.mxu0 0
      %403 = vmatpush1.bf16.msra.mxu0 0
      %404 = vmatprep.subr.bf16.mxu0 0
      %405 = vmatpush1.bf16.msra.mxu0 0
      %406 = vmatprep.subr.bf16.mxu0 0
      %407 = vmatpush1.bf16.msra.mxu0 0
      %408 = vmatprep.subr.bf16.mxu0 0
      %409 = vmatpush1.bf16.msra.mxu0 0
      %410 = vmatprep.subr.bf16.mxu0 0
      %411 = vmatpush1.bf16.msra.mxu0 0
      %412 = vmatprep.subr.bf16.mxu0 0
      %413 = vmatpush1.bf16.msra.mxu0 0
      %414 = vmatprep.subr.bf16.mxu0 0
      %415 = vmatpush1.bf16.msra.mxu0 0
      %416 = vmatprep.subr.bf16.mxu0 0
      %417 = vmatpush1.bf16.msra.mxu0 0
      %418 = vmatprep.subr.bf16.mxu0 0
      %419 = vmatpush1.bf16.msra.mxu0 0
      %420 = vmatprep.subr.bf16.mxu0 0
      %421 = vmatpush1.bf16.msra.mxu0 0
      %422 = vmatprep.subr.bf16.mxu0 0
      %423 = vmatpush1.bf16.msra.mxu0 0
      %424 = vmatprep.subr.bf16.mxu0 0
      %425 = vmatpush1.bf16.msra.mxu0 0
      %426 = vmatprep.mubr.bf16.mxu0 0
      %427 = vmatmul.mubr.bf16.gmra.mrb[0].mxu0 %v380
      %v428 = vpop.f32.mrb[0].mxu0
      %v429 = vadd.f32 0.0, %v428
      %v430 = vpop.f32.mrb[0].mxu0
      %v431 = vpop.f32.mrb[0].mxu0
      %v432 = vadd.f32 0.0, %v431
      %v433 = vpop.f32.mrb[0].mxu0
      %434 = vmatprep.mubr.bf16.mxu0 0
      %435 = vmatmul.mubr.bf16.gmra.mrb[0].mxu0 %v383
      %v436 = vpop.f32.mrb[0].mxu0
      %v437 = vadd.f32 0.0, %v436
      %v438 = vpop.f32.mrb[0].mxu0
      %v439 = vpop.f32.mrb[0].mxu0
      %v440 = vadd.f32 0.0, %v439
      %v441 = vpop.f32.mrb[0].mxu0
      %442 = vmatprep.mubr.bf16.mxu0 0
      %443 = vmatmul.mubr.bf16.gmra.mrb[0].mxu0 %v386
      %v444 = vpop.f32.mrb[0].mxu0
      %v445 = vadd.f32 0.0, %v444
      %v446 = vpop.f32.mrb[0].mxu0
      %v447 = vpop.f32.mrb[0].mxu0
      %v448 = vadd.f32 0.0, %v447
      %v449 = vpop.f32.mrb[0].mxu0
      %450 = vmatprep.mubr.bf16.mxu0 0
      %451 = vmatmul.mubr.bf16.gmra.mrb[0].mxu0 %v389
      %v452 = vpop.f32.mrb[0].mxu0
      %v453 = vadd.f32 0.0, %v452
      %v454 = vpop.f32.mrb[0].mxu0
      %v455 = vpop.f32.mrb[0].mxu0
      %v456 = vadd.f32 0.0, %v455
      %v457 = vpop.f32.mrb[0].mxu0
      %458 = vmatprep.mubr.bf16.mxu0 0
      %459 = vmatmul.mubr.bf16.gmra.mrb[0].mxu0 %v392
      %v460 = vpop.f32.mrb[0].mxu0
      %v461 = vadd.f32 0.0, %v460
      %v462 = vpop.f32.mrb[0].mxu0
      %v463 = vpop.f32.mrb[0].mxu0
      %v464 = vpop.f32.mrb[0].mxu0
      %465 = vdwg.mxu0
      %v468 = vunpack.c.l.b16 %v304
      %v469 = vunpack.c.l.b16 %v305
      %v470 = vpack.c.b16 %v469, %v468
      %v472 = vsel %vm378, %v327, 0
      %v474 = vsel %vm378, %v328, 0
      %v476 = vsel %vm378, %v329, 0
      %v478 = vsel %vm378, %v330, 0
      %v480 = vsel %vm378, %v331, 0
      %482 = vmatprep.subr.bf16.mxu0 0
      %483 = vmatpush1.bf16.msra.mxu0 %v470
      %484 = vmatprep.subr.bf16.mxu0 0
      %485 = vmatpush1.bf16.msra.mxu0 0
      %486 = vmatprep.subr.bf16.mxu0 0
      %487 = vmatpush1.bf16.msra.mxu0 0
      %488 = vmatprep.subr.bf16.mxu0 0
      %489 = vmatpush1.bf16.msra.mxu0 0
      %490 = vmatprep.subr.bf16.mxu0 0
      %491 = vmatpush1.bf16.msra.mxu0 0
      %492 = vmatprep.subr.bf16.mxu0 0
      %493 = vmatpush1.bf16.msra.mxu0 0
      %494 = vmatprep.subr.bf16.mxu0 0
      %495 = vmatpush1.bf16.msra.mxu0 0
      %496 = vmatprep.subr.bf16.mxu0 0
      %497 = vmatpush1.bf16.msra.mxu0 0
      %498 = vmatprep.subr.bf16.mxu0 0
      %499 = vmatpush1.bf16.msra.mxu0 0
      %500 = vmatprep.subr.bf16.mxu0 0
      %501 = vmatpush1.bf16.msra.mxu0 0
      %502 = vmatprep.subr.bf16.mxu0 0
      %503 = vmatpush1.bf16.msra.mxu0 0
      %504 = vmatprep.subr.bf16.mxu0 0
      %505 = vmatpush1.bf16.msra.mxu0 0
      %506 = vmatprep.subr.bf16.mxu0 0
      %507 = vmatpush1.bf16.msra.mxu0 0
      %508 = vmatprep.subr.bf16.mxu0 0
      %509 = vmatpush1.bf16.msra.mxu0 0
      %510 = vmatprep.subr.bf16.mxu0 0
      %511 = vmatpush1.bf16.msra.mxu0 0
      %512 = vmatprep.subr.bf16.mxu0 0
      %513 = vmatpush1.bf16.msra.mxu0 0
      %514 = vmatprep.mubr.bf16.mxu0 0
      %515 = vmatmul.mubr.bf16.gmra.mrb[0].mxu0 %v472
      %v516 = vpop.f32.mrb[0].mxu0
      %v517 = vadd.f32 %v429, %v516
      %v518 = vpop.f32.mrb[0].mxu0
      %v519 = vpop.f32.mrb[0].mxu0
      %v520 = vadd.f32 %v432, %v519
      %v521 = vpop.f32.mrb[0].mxu0
      %522 = vmatprep.mubr.bf16.mxu0 0
      %523 = vmatmul.mubr.bf16.gmra.mrb[0].mxu0 %v474
      %v524 = vpop.f32.mrb[0].mxu0
      %v525 = vadd.f32 %v437, %v524
      %v526 = vpop.f32.mrb[0].mxu0
      %v527 = vpop.f32.mrb[0].mxu0
      %v528 = vadd.f32 %v440, %v527
      %v529 = vpop.f32.mrb[0].mxu0
      %530 = vmatprep.mubr.bf16.mxu0 0
      %531 = vmatmul.mubr.bf16.gmra.mrb[0].mxu0 %v476
      %v532 = vpop.f32.mrb[0].mxu0
      %v533 = vadd.f32 %v445, %v532
      %v534 = vpop.f32.mrb[0].mxu0
      %v535 = vpop.f32.mrb[0].mxu0
      %v536 = vadd.f32 %v448, %v535
      %v537 = vpop.f32.mrb[0].mxu0
      %538 = vmatprep.mubr.bf16.mxu0 0
      %539 = vmatmul.mubr.bf16.gmra.mrb[0].mxu0 %v478
      %v540 = vpop.f32.mrb[0].mxu0
      %v541 = vadd.f32 %v453, %v540
      %v542 = vpop.f32.mrb[0].mxu0
      %v543 = vpop.f32.mrb[0].mxu0
      %v544 = vadd.f32 %v456, %v543
      %v545 = vpop.f32.mrb[0].mxu0
      %546 = vmatprep.mubr.bf16.mxu0 0
      %547 = vmatmul.mubr.bf16.gmra.mrb[0].mxu0 %v480
      %v548 = vpop.f32.mrb[0].mxu0
      %v549 = vadd.f32 %v461, %v548
      %v550 = vpop.f32.mrb[0].mxu0
      %v551 = vpop.f32.mrb[0].mxu0
      %v552 = vpop.f32.mrb[0].mxu0
      %553 = vdwg.mxu0
      %v554 = vld [vmem:[%s272 + $0x4] sm:$0xf]
      %v555 = vld [vmem:[%s272 + $0x8] sm:$0xf]
      %v556 = vld [vmem:[%s272 + $0xc] sm:$0xf]
      %v557 = vld [vmem:[%s272 + $0x10] sm:$0xf]
      %v558 = vld [vmem:[%s272 + $0x14] sm:$0xf]
      %v559 = vld [vmem:[%s272 + $0x18] sm:$0xf]
      %v560 = vld [vmem:[%s272 + $0x1c] sm:$0xf]
      %v561 = vld [vmem:[%s272 + $0x20] sm:$0xf]
      %v562 = vld [vmem:[%s272 + $0x24] sm:$0xf]
      %s563 = scalar_lea.vmem %s1, 16
      %v564 = vld [vmem:[%s563] sm:$0xf]
      %v565 = vld [vmem:[%s563 + $0x4] sm:$0xf]
      %v575 = vunpack.c.l.b16 %v554
      %v576 = vunpack.c.l.b16 %v555
      %v577 = vunpack.c.l.b16 %v556
      %v578 = vunpack.c.l.b16 %v557
      %v579 = vunpack.c.l.b16 %v558
      %v580 = vunpack.c.l.b16 %v559
      %v581 = vunpack.c.l.b16 %v560
      %v582 = vunpack.c.l.b16 %v561
      %v583 = vunpack.c.l.b16 %v562
      %v584 = vpack.c.b16 %v576, %v575
      %v585 = vpack.c.b16 %v578, %v577
      %v586 = vpack.c.b16 %v580, %v579
      %v587 = vpack.c.b16 %v582, %v581
      %v588 = vpack.c.b16 %v583, %v583
      %v590 = vshrl.u32 %v584, 16
      %v592 = vshll.u32 %v584, 16
      %v594 = vrot.slane %v592, 1
      %v595 = vor.u32 %v590, %v594
      %v597 = vshll.u32 %v585, 16
      %v599 = vrot.slane %v597, 1
      %v600 = vsel %vm332, %v595, %v599
      %v601 = vshrl.u32 %v585, 16
      %v603 = vor.u32 %v601, %v599
      %v605 = vshll.u32 %v586, 16
      %v607 = vrot.slane %v605, 1
      %v608 = vsel %vm332, %v603, %v607
      %v609 = vshrl.u32 %v586, 16
      %v611 = vor.u32 %v609, %v607
      %v613 = vshll.u32 %v587, 16
      %v615 = vrot.slane %v613, 1
      %v616 = vsel %vm332, %v611, %v615
      %v617 = vshrl.u32 %v587, 16
      %v619 = vor.u32 %v617, %v615
      %v621 = vshll.u32 %v588, 16
      %v623 = vrot.slane %v621, 1
      %v624 = vsel %vm332, %v619, %v623
      %v625 = vshrl.u32 %v588, 16
      %v627 = vor.u32 %v625, %v623
      %v630 = vunpack.c.l.b16 %v564
      %v631 = vunpack.c.l.b16 %v565
      %v632 = vpack.c.b16 %v631, %v630
      %v635 = vsel %vm378, %v600, 0
      %v638 = vsel %vm378, %v608, 0
      %v641 = vsel %vm378, %v616, 0
      %v644 = vsel %vm378, %v624, 0
      %v647 = vsel %vm378, %v627, 0
      %649 = vmatprep.subr.bf16.mxu0 0
      %650 = vmatpush1.bf16.msra.mxu0 %v632
      %651 = vmatprep.subr.bf16.mxu0 0
      %652 = vmatpush1.bf16.msra.mxu0 0
      %653 = vmatprep.subr.bf16.mxu0 0
      %654 = vmatpush1.bf16.msra.mxu0 0
      %655 = vmatprep.subr.bf16.mxu0 0
      %656 = vmatpush1.bf16.msra.mxu0 0
      %657 = vmatprep.subr.bf16.mxu0 0
      %658 = vmatpush1.bf16.msra.mxu0 0
      %659 = vmatprep.subr.bf16.mxu0 0
      %660 = vmatpush1.bf16.msra.mxu0 0
      %661 = vmatprep.subr.bf16.mxu0 0
      %662 = vmatpush1.bf16.msra.mxu0 0
      %663 = vmatprep.subr.bf16.mxu0 0
      %664 = vmatpush1.bf16.msra.mxu0 0
      %665 = vmatprep.subr.bf16.mxu0 0
      %666 = vmatpush1.bf16.msra.mxu0 0
      %667 = vmatprep.subr.bf16.mxu0 0
      %668 = vmatpush1.bf16.msra.mxu0 0
      %669 = vmatprep.subr.bf16.mxu0 0
      %670 = vmatpush1.bf16.msra.mxu0 0
      %671 = vmatprep.subr.bf16.mxu0 0
      %672 = vmatpush1.bf16.msra.mxu0 0
      %673 = vmatprep.subr.bf16.mxu0 0
      %674 = vmatpush1.bf16.msra.mxu0 0
      %675 = vmatprep.subr.bf16.mxu0 0
      %676 = vmatpush1.bf16.msra.mxu0 0
      %677 = vmatprep.subr.bf16.mxu0 0
      %678 = vmatpush1.bf16.msra.mxu0 0
      %679 = vmatprep.subr.bf16.mxu0 0
      %680 = vmatpush1.bf16.msra.mxu0 0
      %681 = vmatprep.mubr.bf16.mxu0 0
      %682 = vmatmul.mubr.bf16.gmra.mrb[0].mxu0 %v635
      %v683 = vpop.f32.mrb[0].mxu0
      %v684 = vadd.f32 0.0, %v683
      %v685 = vpop.f32.mrb[0].mxu0
      %v686 = vpop.f32.mrb[0].mxu0
      %v687 = vadd.f32 0.0, %v686
      %v688 = vpop.f32.mrb[0].mxu0
      %689 = vmatprep.mubr.bf16.mxu0 0
      %690 = vmatmul.mubr.bf16.gmra.mrb[0].mxu0 %v638
      %v691 = vpop.f32.mrb[0].mxu0
      %v692 = vadd.f32 0.0, %v691
      %v693 = vpop.f32.mrb[0].mxu0
      %v694 = vpop.f32.mrb[0].mxu0
      %v695 = vadd.f32 0.0, %v694
      %v696 = vpop.f32.mrb[0].mxu0
      %697 = vmatprep.mubr.bf16.mxu0 0
      %698 = vmatmul.mubr.bf16.gmra.mrb[0].mxu0 %v641
      %v699 = vpop.f32.mrb[0].mxu0
      %v700 = vadd.f32 0.0, %v699
      %v701 = vpop.f32.mrb[0].mxu0
      %v702 = vpop.f32.mrb[0].mxu0
      %v703 = vadd.f32 0.0, %v702
      %v704 = vpop.f32.mrb[0].mxu0
      %705 = vmatprep.mubr.bf16.mxu0 0
      %706 = vmatmul.mubr.bf16.gmra.mrb[0].mxu0 %v644
      %v707 = vpop.f32.mrb[0].mxu0
      %v708 = vadd.f32 0.0, %v707
      %v709 = vpop.f32.mrb[0].mxu0
      %v710 = vpop.f32.mrb[0].mxu0
      %v711 = vadd.f32 0.0, %v710
      %v712 = vpop.f32.mrb[0].mxu0
      %713 = vmatprep.mubr.bf16.mxu0 0
      %714 = vmatmul.mubr.bf16.gmra.mrb[0].mxu0 %v647
      %v715 = vpop.f32.mrb[0].mxu0
      %v716 = vadd.f32 0.0, %v715
      %v717 = vpop.f32.mrb[0].mxu0
      %v718 = vpop.f32.mrb[0].mxu0
      %v719 = vpop.f32.mrb[0].mxu0
      %720 = vdwg.mxu0
      %v721 = vadd.f32 %v517, %v684
      %v722 = vadd.f32 %v520, %v687
      %v723 = vadd.f32 %v525, %v692
      %v724 = vadd.f32 %v528, %v695
      %v725 = vadd.f32 %v533, %v700
      %v726 = vadd.f32 %v536, %v703
      %v727 = vadd.f32 %v541, %v708
      %v728 = vadd.f32 %v544, %v711
      %v729 = vadd.f32 %v549, %v716
      %v730 = vld [vmem:[%s272 + $0x4] sm:$0xe]
      %v731 = vld [vmem:[%s272 + $0x8] sm:$0xf]
      %v732 = vld [vmem:[%s272 + $0xc] sm:$0xf]
      %v733 = vld [vmem:[%s272 + $0x10] sm:$0xf]
      %v734 = vld [vmem:[%s272 + $0x14] sm:$0xf]
      %v735 = vld [vmem:[%s272 + $0x18] sm:$0xf]
      %v736 = vld [vmem:[%s272 + $0x1c] sm:$0xf]
      %v737 = vld [vmem:[%s272 + $0x20] sm:$0xf]
      %v738 = vld [vmem:[%s272 + $0x24] sm:$0xf]
      %v739 = vld [vmem:[%s272 + $0x28] sm:$0x1]
      %s740 = scalar_lea.vmem %s1, 24
      %v741 = vld [vmem:[%s740] sm:$0xf]
      %v742 = vld [vmem:[%s740 + $0x4] sm:$0xf]
      %v753 = vunpack.c.l.b16 %v730
      %v754 = vunpack.c.l.b16 %v731
      %v755 = vunpack.c.l.b16 %v732
      %v756 = vunpack.c.l.b16 %v733
      %v757 = vunpack.c.l.b16 %v734
      %v758 = vunpack.c.l.b16 %v735
      %v759 = vunpack.c.l.b16 %v736
      %v760 = vunpack.c.l.b16 %v737
      %v761 = vunpack.c.l.b16 %v738
      %v762 = vunpack.c.l.b16 %v739
      %v763 = vpack.c.b16 %v754, %v753
      %v764 = vpack.c.b16 %v756, %v755
      %v765 = vpack.c.b16 %v758, %v757
      %v766 = vpack.c.b16 %v760, %v759
      %v767 = vpack.c.b16 %v762, %v761
      %vm768 = vcmask 1046528
      %v769 = vrot.slane %v763, 1
      %v770 = vrot.slane %v764, 1
      %v771 = vsel %vm768, %v769, %v770
      %v772 = vrot.slane %v765, 1
      %v773 = vsel %vm768, %v770, %v772
      %v774 = vrot.slane %v766, 1
      %v775 = vsel %vm768, %v772, %v774
      %v776 = vrot.slane %v767, 1
      %v777 = vsel %vm768, %v774, %v776
      %v780 = vunpack.c.l.b16 %v741
      %v781 = vunpack.c.l.b16 %v742
      %v782 = vpack.c.b16 %v781, %v780
      %v785 = vsel %vm378, %v771, 0
      %v788 = vsel %vm378, %v773, 0
      %v791 = vsel %vm378, %v775, 0
      %v794 = vsel %vm378, %v777, 0
      %v797 = vsel %vm378, %v776, 0
      %799 = vmatprep.subr.bf16.mxu0 0
      %800 = vmatpush1.bf16.msra.mxu0 %v782
      %801 = vmatprep.subr.bf16.mxu0 0
      %802 = vmatpush1.bf16.msra.mxu0 0
      %803 = vmatprep.subr.bf16.mxu0 0
      %804 = vmatpush1.bf16.msra.mxu0 0
      %805 = vmatprep.subr.bf16.mxu0 0
      %806 = vmatpush1.bf16.msra.mxu0 0
      %807 = vmatprep.subr.bf16.mxu0 0
      %808 = vmatpush1.bf16.msra.mxu0 0
      %809 = vmatprep.subr.bf16.mxu0 0
      %810 = vmatpush1.bf16.msra.mxu0 0
      %811 = vmatprep.subr.bf16.mxu0 0
      %812 = vmatpush1.bf16.msra.mxu0 0
      %813 = vmatprep.subr.bf16.mxu0 0
      %814 = vmatpush1.bf16.msra.mxu0 0
      %815 = vmatprep.subr.bf16.mxu0 0
      %816 = vmatpush1.bf16.msra.mxu0 0
      %817 = vmatprep.subr.bf16.mxu0 0
      %818 = vmatpush1.bf16.msra.mxu0 0
      %819 = vmatprep.subr.bf16.mxu0 0
      %820 = vmatpush1.bf16.msra.mxu0 0
      %821 = vmatprep.subr.bf16.mxu0 0
      %822 = vmatpush1.bf16.msra.mxu0 0
      %823 = vmatprep.subr.bf16.mxu0 0
      %824 = vmatpush1.bf16.msra.mxu0 0
      %825 = vmatprep.subr.bf16.mxu0 0
      %826 = vmatpush1.bf16.msra.mxu0 0
      %827 = vmatprep.subr.bf16.mxu0 0
      %828 = vmatpush1.bf16.msra.mxu0 0
      %829 = vmatprep.subr.bf16.mxu0 0
      %830 = vmatpush1.bf16.msra.mxu0 0
      %831 = vmatprep.mubr.bf16.mxu0 0
      %832 = vmatmul.mubr.bf16.gmra.mrb[0].mxu0 %v785
      %v833 = vpop.f32.mrb[0].mxu0
      %v834 = vadd.f32 0.0, %v833
      %v835 = vpop.f32.mrb[0].mxu0
      %v836 = vpop.f32.mrb[0].mxu0
      %v837 = vadd.f32 0.0, %v836
      %v838 = vpop.f32.mrb[0].mxu0
      %839 = vmatprep.mubr.bf16.mxu0 0
      %840 = vmatmul.mubr.bf16.gmra.mrb[0].mxu0 %v788
      %v841 = vpop.f32.mrb[0].mxu0
      %v842 = vadd.f32 0.0, %v841
      %v843 = vpop.f32.mrb[0].mxu0
      %v844 = vpop.f32.mrb[0].mxu0
      %v845 = vadd.f32 0.0, %v844
      %v846 = vpop.f32.mrb[0].mxu0
      %847 = vmatprep.mubr.bf16.mxu0 0
      %848 = vmatmul.mubr.bf16.gmra.mrb[0].mxu0 %v791
      %v849 = vpop.f32.mrb[0].mxu0
      %v850 = vadd.f32 0.0, %v849
      %v851 = vpop.f32.mrb[0].mxu0
      %v852 = vpop.f32.mrb[0].mxu0
      %v853 = vadd.f32 0.0, %v852
      %v854 = vpop.f32.mrb[0].mxu0
      %855 = vmatprep.mubr.bf16.mxu0 0
      %856 = vmatmul.mubr.bf16.gmra.mrb[0].mxu0 %v794
      %v857 = vpop.f32.mrb[0].mxu0
      %v858 = vadd.f32 0.0, %v857
      %v859 = vpop.f32.mrb[0].mxu0
      %v860 = vpop.f32.mrb[0].mxu0
      %v861 = vadd.f32 0.0, %v860
      %v862 = vpop.f32.mrb[0].mxu0
      %863 = vmatprep.mubr.bf16.mxu0 0
      %864 = vmatmul.mubr.bf16.gmra.mrb[0].mxu0 %v797
      %v865 = vpop.f32.mrb[0].mxu0
      %v866 = vadd.f32 0.0, %v865
      %v867 = vpop.f32.mrb[0].mxu0
      %v868 = vpop.f32.mrb[0].mxu0
      %v869 = vpop.f32.mrb[0].mxu0
      %870 = vdwg.mxu0
      %v871 = vadd.f32 %v721, %v834
      %v872 = vadd.f32 %v722, %v837
      %v873 = vadd.f32 %v723, %v842
      %v874 = vadd.f32 %v724, %v845
      %v875 = vadd.f32 %v725, %v850
      %v876 = vadd.f32 %v726, %v853
      %v877 = vadd.f32 %v727, %v858
      %v878 = vadd.f32 %v728, %v861
      %v879 = vadd.f32 %v729, %v866
      %v880 = vld [vmem:[%s2] sm:$0xff]
      %v881 = vld [vmem:[%s2 + $0x8] sm:$0xff]
      %v882 = vld [vmem:[%s2 + $0x10] sm:$0xff]
      %v883 = vld [vmem:[%s2 + $0x18] sm:$0xff]
      %v884 = vld [vmem:[%s2 + $0x20] sm:$0xff]
      %v885 = vld [vmem:[%s2 + $0x28] sm:$0xff]
      %v886 = vld [vmem:[%s2 + $0x30] sm:$0xff]
      %v887 = vld [vmem:[%s2 + $0x38] sm:$0xff]
      %v888 = vld [vmem:[%s2 + $0x40] sm:$0x7f]
      %890 = vset.pattern.permute.xlu0 0
      %891 = vperm.xlu0 %890, %v880
      %v892 = vpop.permute.xlu0 %891
      %895 = vset.pattern.permute.xlu0 0
      %896 = vperm.xlu0 %895, %v881
      %v897 = vpop.permute.xlu0 %896
      %900 = vset.pattern.permute.xlu0 0
      %901 = vperm.xlu0 %900, %v882
      %v902 = vpop.permute.xlu0 %901
      %905 = vset.pattern.permute.xlu0 0
      %906 = vperm.xlu0 %905, %v883
      %v907 = vpop.permute.xlu0 %906
      %910 = vset.pattern.permute.xlu0 0
      %911 = vperm.xlu0 %910, %v884
      %v912 = vpop.permute.xlu0 %911
      %915 = vset.pattern.permute.xlu0 0
      %916 = vperm.xlu0 %915, %v885
      %v917 = vpop.permute.xlu0 %916
      %920 = vset.pattern.permute.xlu0 0
      %921 = vperm.xlu0 %920, %v886
      %v922 = vpop.permute.xlu0 %921
      %925 = vset.pattern.permute.xlu0 0
      %926 = vperm.xlu0 %925, %v887
      %v927 = vpop.permute.xlu0 %926
      %930 = vset.pattern.permute.xlu0 0
      %931 = vperm.xlu0 %930, %v888
      %v932 = vpop.permute.xlu0 %931
      %v934 = vmul.f32 %v871, %v892
      %v935 = vmul.f32 %v872, %v897
      %v936 = vmul.f32 %v873, %v902
      %v937 = vmul.f32 %v874, %v907
      %v938 = vmul.f32 %v875, %v912
      %v939 = vmul.f32 %v876, %v917
      %v940 = vmul.f32 %v877, %v922
      %v941 = vmul.f32 %v878, %v927
      %v942 = vmul.f32 %v879, %v932
      %vm943 = vcmask 64512
      %v944 = vsel %vm943, %v934, 0.0
      %v945 = vsel %vm943, %v935, 0.0
      %v946 = vadd.f32 %v944, %v945
      %v947 = vsel %vm943, %v936, 0.0
      %v948 = vadd.f32 %v946, %v947
      %v949 = vsel %vm943, %v937, 0.0
      %v950 = vadd.f32 %v948, %v949
      %v951 = vsel %vm943, %v938, 0.0
      %v952 = vadd.f32 %v950, %v951
      %v953 = vsel %vm943, %v939, 0.0
      %v954 = vadd.f32 %v952, %v953
      %v955 = vsel %vm943, %v940, 0.0
      %v956 = vadd.f32 %v954, %v955
      %v957 = vsel %vm943, %v941, 0.0
      %v958 = vadd.f32 %v956, %v957
      %vm959 = vcmask 63488
      %v960 = vsel %vm959, %v942, 0.0
      %v961 = vadd.f32 %v958, %v960
      %v962 = vrot.slane %v961, 4
      %v963 = vadd.f32 %v961, %v962
      %v964 = vrot.slane %v963, 2
      %v965 = vadd.f32 %v963, %v964
      %v966 = vrot.slane %v965, 1
      %v967 = vadd.f32 %v965, %v966
      %v968 = vmul.f32 %v967, 0.015625
      %v969 = vsub.f32 %v871, %v968
      %v970 = vsub.f32 %v872, %v968
      %v971 = vsub.f32 %v873, %v968
      %v972 = vsub.f32 %v874, %v968
      %v973 = vsub.f32 %v875, %v968
      %v974 = vsub.f32 %v876, %v968
      %v975 = vsub.f32 %v877, %v968
      %v976 = vsub.f32 %v878, %v968
      %v977 = vsub.f32 %v879, %v968
      %v978 = vmul.f32 %v969, %v892
      %v979 = vmul.f32 %v970, %v897
      %v980 = vmul.f32 %v971, %v902
      %v981 = vmul.f32 %v972, %v907
      %v982 = vmul.f32 %v973, %v912
      %v983 = vmul.f32 %v974, %v917
      %v984 = vmul.f32 %v975, %v922
      %v985 = vmul.f32 %v976, %v927
      %v986 = vmul.f32 %v977, %v932
      %v987 = vmul.f32 %v978, %v978
      %v988 = vmul.f32 %v979, %v979
      %v989 = vmul.f32 %v980, %v980
      %v990 = vmul.f32 %v981, %v981
      %v991 = vmul.f32 %v982, %v982
      %v992 = vmul.f32 %v983, %v983
      %v993 = vmul.f32 %v984, %v984
      %v994 = vmul.f32 %v985, %v985
      %v995 = vmul.f32 %v986, %v986
      %v996 = vsel %vm943, %v987, 0.0
      %v997 = vsel %vm943, %v988, 0.0
      %v998 = vadd.f32 %v996, %v997
      %v999 = vsel %vm943, %v989, 0.0
      %v1000 = vadd.f32 %v998, %v999
      %v1001 = vsel %vm943, %v990, 0.0
      %v1002 = vadd.f32 %v1000, %v1001
      %v1003 = vsel %vm943, %v991, 0.0
      %v1004 = vadd.f32 %v1002, %v1003
      %v1005 = vsel %vm943, %v992, 0.0
      %v1006 = vadd.f32 %v1004, %v1005
      %v1007 = vsel %vm943, %v993, 0.0
      %v1008 = vadd.f32 %v1006, %v1007
      %v1009 = vsel %vm943, %v994, 0.0
      %v1010 = vadd.f32 %v1008, %v1009
      %v1011 = vsel %vm959, %v995, 0.0
      %v1012 = vadd.f32 %v1010, %v1011
      %v1013 = vrot.slane %v1012, 4
      %v1014 = vadd.f32 %v1012, %v1013
      %v1015 = vrot.slane %v1014, 2
      %v1016 = vadd.f32 %v1014, %v1015
      %v1017 = vrot.slane %v1016, 1
      %v1018 = vadd.f32 %v1016, %v1017
      %vm1019 = vcmask 57344
      %1020 = vst.msk [vmem:[%s287] sm:$0x1] %vm1019, %v967
      %1021 = vst.msk [vmem:[%s293] sm:$0x1] %vm1019, %v1018
      %v1022 = vpack.c.bf16 %v872, %v871
      %v1023 = vpack.c.bf16 %v874, %v873
      %v1024 = vpack.c.bf16 %v876, %v875
      %v1025 = vpack.c.bf16 %v878, %v877
      %v1026 = vpack.c.bf16 %v879, %v879
      %vm1027 = vcmask 60416
      %1028 = vst.msk [vmem:[%s281] sm:$0xf] %vm1027, %v1022
      %v1031 = vunpack.c.h.b16 %v1022
      %v1032 = vunpack.c.l.b16 %v1023
      %v1033 = vpack.c.b16 %v1031, %v1031
      %v1034 = vpack.c.b16 %v1032, %v1032
      %vm1035 = vsmask.f32 3328
      %vm1036 = vsmask.f32 7440
      %vm1037 = vmor %vm1035, %vm1036
      %v1039 = vshrl.u32 %v1033, 16
      %v1041 = vrot.slane %v1039, 4
      %v1042 = vshll.u32 %v1033, 16
      %v1044 = vrot.slane %v1042, 5
      %v1045 = vor.u32 %v1041, %v1044
      %v1046 = vrot.slane %v1045, 4
      %v1048 = vshll.u32 %v1034, 16
      %v1050 = vrot.slane %v1048, 5
      %v1051 = vsel %vm1037, %v1046, %v1050
      %s1053 = scalar_lea.vmem %s281, 4
      %1054 = vst.msk [vmem:[%s1053] sm:$0xf] %vm1027, %v1051
      %v1055 = vunpack.c.h.b16 %v1023
      %v1056 = vpack.c.b16 %v1055, %v1055
      %vm1057 = vcmask 1042432
      %vm1058 = vcmask 1046532
      %vm1059 = vmor %vm1057, %vm1058
      %v1060 = vrot.slane %v1034, 5
      %v1061 = vrot.slane %v1060, 4
      %v1062 = vrot.slane %v1056, 5
      %v1063 = vsel %vm1059, %v1061, %v1062
      %s1065 = scalar_lea.vmem %s281, 8
      %1066 = vst.msk [vmem:[%s1065] sm:$0xf] %vm1027, %v1063
      %v1068 = vunpack.c.l.b16 %v1024
      %v1069 = vpack.c.b16 %v1068, %v1068
      %vm1070 = vsmask.f32 2304
      %vm1071 = vsmask.f32 6416
      %vm1072 = vmor %vm1070, %vm1071
      %v1074 = vshrl.u32 %v1056, 16
      %v1076 = vrot.slane %v1074, 5
      %v1077 = vshll.u32 %v1056, 16
      %v1079 = vrot.slane %v1077, 6
      %v1080 = vor.u32 %v1076, %v1079
      %v1081 = vrot.slane %v1080, 4
      %v1083 = vshrl.u32 %v1069, 16
      %v1085 = vrot.slane %v1083, 5
      %v1086 = vshll.u32 %v1069, 16
      %v1088 = vrot.slane %v1086, 6
      %v1089 = vor.u32 %v1085, %v1088
      %v1090 = vsel %vm1072, %v1081, %v1089
      %s1092 = scalar_lea.vmem %s281, 12
      %1093 = vst.msk [vmem:[%s1092] sm:$0xf] %vm1027, %v1090
      %v1094 = vunpack.c.h.b16 %v1024
      %v1095 = vpack.c.b16 %v1094, %v1094
      %vm1096 = vcmask 1041408
      %vm1097 = vcmask 1045508
      %vm1098 = vmor %vm1096, %vm1097
      %v1099 = vrot.slane %v1069, 6
      %v1100 = vrot.slane %v1099, 4
      %v1101 = vrot.slane %v1095, 6
      %v1102 = vsel %vm1098, %v1100, %v1101
      %s1104 = scalar_lea.vmem %s281, 16
      %1105 = vst.msk [vmem:[%s1104] sm:$0xf] %vm1027, %v1102
      %v1107 = vunpack.c.l.b16 %v1025
      %v1108 = vpack.c.b16 %v1107, %v1107
      %vm1109 = vsmask.f32 1280
      %vm1110 = vsmask.f32 5392
      %vm1111 = vmor %vm1109, %vm1110
      %v1113 = vshrl.u32 %v1095, 16
      %v1115 = vrot.slane %v1113, 6
      %v1116 = vshll.u32 %v1095, 16
      %v1118 = vrot.slane %v1116, 7
      %v1119 = vor.u32 %v1115, %v1118
      %v1120 = vrot.slane %v1119, 4
      %v1122 = vshrl.u32 %v1108, 16
      %v1124 = vrot.slane %v1122, 6
      %v1125 = vshll.u32 %v1108, 16
      %v1127 = vrot.slane %v1125, 7
      %v1128 = vor.u32 %v1124, %v1127
      %v1129 = vsel %vm1111, %v1120, %v1128
      %s1131 = scalar_lea.vmem %s281, 20
      %1132 = vst.msk [vmem:[%s1131] sm:$0xf] %vm1027, %v1129
      %v1133 = vunpack.c.h.b16 %v1025
      %v1134 = vpack.c.b16 %v1133, %v1133
      %vm1135 = vcmask 1040384
      %vm1136 = vcmask 1044484
      %vm1137 = vmor %vm1135, %vm1136
      %v1138 = vrot.slane %v1108, 7
      %v1139 = vrot.slane %v1138, 4
      %v1140 = vrot.slane %v1134, 7
      %v1141 = vsel %vm1137, %v1139, %v1140
      %s1143 = scalar_lea.vmem %s281, 24
      %1144 = vst.msk [vmem:[%s1143] sm:$0xf] %vm1027, %v1141
      %v1146 = vunpack.c.l.b16 %v1026
      %v1147 = vpack.c.b16 %v1146, %v1146
      %vm1148 = vsmask.f32 256
      %vm1149 = vsmask.f32 4368
      %vm1150 = vmor %vm1148, %vm1149
      %v1152 = vshrl.u32 %v1134, 16
      %v1154 = vrot.slane %v1152, 7
      %v1155 = vrot.slane %v1154, 4
      %v1157 = vshrl.u32 %v1147, 16
      %v1159 = vrot.slane %v1157, 7
      %v1160 = vshll.u32 %v1147, 16
      %v1162 = vor.u32 %v1159, %v1160
      %v1163 = vsel %vm1150, %v1155, %v1162
      %s1165 = scalar_lea.vmem %s281, 28
      %1166 = vst.msk [vmem:[%s1165] sm:$0xf] %vm1027, %v1163
      %p1167 = scmp.lt.s32.totalorder %s21, 1
      %s1168 = scalar_select %p1167, %s21, 1
      %p1169 = scmp.lt.s32.totalorder %s22, 0
      %s1170 = scalar_select %p1169, %s22, 0
      %s1171 = smul.addr %s1170, 8
      %s1172 = smul.addr %s1168, 8
      %s1173 = sadd.s32 %s1171, %s1172
      %s1174 = smul.addr %s1173, 4
      %s1175 = scalar_lea.vmem %s3, %s1174
      %p1176 = scmp.lt.s32.totalorder %s21, 1
      %s1177 = scalar_select %p1176, %s21, 1
      %p1178 = scmp.lt.s32.totalorder %s22, 0
      %s1179 = scalar_select %p1178, %s22, 0
      %s1180 = sadd.s32 %s1179, %s1177
      %s1181 = scalar_lea.vmem %s4, %s1180
      %p1182 = scmp.lt.s32.totalorder %s21, 1
      %s1183 = scalar_select %p1182, %s21, 1
      %p1184 = scmp.lt.s32.totalorder %s22, 0
      %s1185 = scalar_select %p1184, %s22, 0
      %s1186 = sadd.s32 %s1185, %s1183
      %s1187 = scalar_lea.vmem %s5, %s1186
      // Predicated region
      $region33: #{downsample_conv.2} parent=31 // pred_check
        %p1188 = pneg %p119
      $region34: #{downsample_conv.2} parent=31 // pred_check_branch
        %1190 = sbr.rel (%p1188) target = $region36
      $region35: #{downsample_conv.2} parent=31 // pred_region
        _
      $region36: #{downsample_conv.2} parent=31 // pred_fallthru
        _
      // Predicated region
      $region37: #{downsample_conv.2} parent=31 // pred_check
        %p1191 = pneg %p147
      $region38: #{downsample_conv.2} parent=31 // pred_check_branch
        %1193 = sbr.rel (%p1191) target = $region40
      $region39: #{downsample_conv.2} parent=31 // pred_region
        _
      $region40: #{downsample_conv.2} parent=31 // pred_fallthru
        _
      // Predicated region
      $region41: #{downsample_conv.2} parent=31 // pred_check
        %p1194 = pneg %p175
      $region42: #{downsample_conv.2} parent=31 // pred_check_branch
        %1196 = sbr.rel (%p1194) target = $region44
      $region43: #{downsample_conv.2} parent=31 // pred_region
        _
      $region44: #{downsample_conv.2} parent=31 // pred_fallthru
        _
    $region32: #{downsample_conv.2} parent=5 // pred_fallthru
      _
    %p1197 = scmp.le.s32.totalorder 2, %s12
    // Predicated region
    $region45: #{downsample_conv.2} parent=5 // pred_check
      %p1198 = pneg %p1197
    $region46: #{downsample_conv.2} parent=5 // pred_check_branch
      %1200 = sbr.rel (%p1198) target = $region48
    $region47: #{downsample_conv.2} parent=5 // pred_region
      %s1201 = ssub.s32 %s12, 2
      // Predicated region
      $region49: #{downsample_conv.2} parent=47 // pred_check
        %p1202 = pneg %p125
      $region50: #{downsample_conv.2} parent=47 // pred_check_branch
        %1204 = sbr.rel (%p1202) target = $region52
      $region51: #{downsample_conv.2} parent=47 // pred_region
        %p1205 = scmp.lt.s32.totalorder %s23, 1
        %s1206 = scalar_select %p1205, %s23, 1
        %p1207 = scmp.lt.s32.totalorder %s24, 0
        %s1208 = scalar_select %p1207, %s24, 0
        %s1209 = smul.addr %s1208, 8
        %s1210 = smul.addr %s1206, 8
        %s1211 = sadd.s32 %s1209, %s1210
        %s1212 = smul.addr %s1211, 4
        %s1213 = scalar_lea.vmem %s3, %s1212
      $region52: #{downsample_conv.2} parent=47 // pred_fallthru
        _
      // Predicated region
      $region53: #{downsample_conv.2} parent=47 // pred_check
        %p1214 = pneg %p153
      $region54: #{downsample_conv.2} parent=47 // pred_check_branch
        %1216 = sbr.rel (%p1214) target = $region56
      $region55: #{downsample_conv.2} parent=47 // pred_region
        %p1217 = scmp.lt.s32.totalorder %s23, 1
        %s1218 = scalar_select %p1217, %s23, 1
        %p1219 = scmp.lt.s32.totalorder %s24, 0
        %s1220 = scalar_select %p1219, %s24, 0
        %s1221 = sadd.s32 %s1220, %s1218
        %s1222 = scalar_lea.vmem %s4, %s1221
      $region56: #{downsample_conv.2} parent=47 // pred_fallthru
        _
      // Predicated region
      $region57: #{downsample_conv.2} parent=47 // pred_check
        %p1223 = pneg %p181
      $region58: #{downsample_conv.2} parent=47 // pred_check_branch
        %1225 = sbr.rel (%p1223) target = $region60
      $region59: #{downsample_conv.2} parent=47 // pred_region
        %p1226 = scmp.lt.s32.totalorder %s23, 1
        %s1227 = scalar_select %p1226, %s23, 1
        %p1228 = scmp.lt.s32.totalorder %s24, 0
        %s1229 = scalar_select %p1228, %s24, 0
        %s1230 = sadd.s32 %s1229, %s1227
        %s1231 = scalar_lea.vmem %s5, %s1230
      $region60: #{downsample_conv.2} parent=47 // pred_fallthru
        _
    $region48: #{downsample_conv.2} parent=5 // pred_fallthru
      _
  $region6: #{downsample_conv.2} parent=0 // loop_footer
    %s16 = sadd.s32 1, %s12
  $region7: #{downsample_conv.2} parent=0 // loop_footer_branch
    %11 = sbr.rel target = $region3
  $region8: #{downsample_conv.2} parent=0 // loop_exit
    _

</llo_original>
